<compile_context>
chip_gen: v6e
topology: v6e:2x2x1
jax: 0.10.0
libtpu: 0.0.40
codegen_flags: <defaults>
</compile_context>

<pallas_src>
import functools
import math

import numpy as np
import jax
import jax.numpy as jnp
from jax.experimental import pallas as pl
from jax.experimental.pallas import tpu as pltpu


def _attn_kernel(x_ref, wqkv_ref, bqkv_ref, wp_ref, bp_ref, o_ref,
                 *, bb, T, C, n_head):
    """One grid step: `bb` batch elements, all heads, full double-causal attention."""
    D = C // n_head

    # Fused Q/K/V projection: bf16 operands, f32 accumulation.  x arrives f32 and
    # is cast on the VPU (hides under the MXU; no wrapper-side HBM round trip).
    x = x_ref[...].astype(jnp.bfloat16)                                    # (bb*T, C)
    qkv_f32 = jnp.dot(x, wqkv_ref[...],
                      preferred_element_type=jnp.float32) + bqkv_ref[...]  # (bb*T, 3C) f32
    qkv = qkv_f32.astype(jnp.bfloat16).reshape(bb, T, 3 * C)               # bf16 attention operands

    # Additive double-causal mask from iota (0 keep / -1e30 drop), pre-broadcast
    # once to (bb, T, T).  Column 0 is always kept so no fully-masked row / NaN.
    rows = jax.lax.broadcasted_iota(jnp.int32, (T, T), 0)
    cols = jax.lax.broadcasted_iota(jnp.int32, (T, T), 1)
    keep = (cols <= rows) | (((rows & 1) == 1) & (cols == rows + 1))
    add_mask = jnp.broadcast_to(
        jnp.where(keep, 0.0, -1e30).astype(jnp.float32)[None], (bb, T, T))

    # Per-head attention core (1/sqrt(D) already folded into Wq/bq at prep time).
    # bf16 operands feed the MXU at native rate; mask/softmax math stays in f32.
    ys = []
    for h in range(n_head):
        qh = qkv[:, :, 0 * C + h * D:0 * C + (h + 1) * D]                  # (bb, T, D) bf16
        kh = qkv[:, :, 1 * C + h * D:1 * C + (h + 1) * D]
        vh = qkv[:, :, 2 * C + h * D:2 * C + (h + 1) * D]

        s = jnp.einsum('btd,bsd->bts', qh, kh,
                       preferred_element_type=jnp.float32) + add_mask      # (bb, T, T) f32
        m = jnp.max(s, axis=-1, keepdims=True)
        e = jnp.exp(s - m)
        p = (e * pl.reciprocal(jnp.sum(e, axis=-1, keepdims=True),
                               approx=True)).astype(jnp.bfloat16)
        # attn_drop: identity at inference time.
        ys.append(jnp.einsum('bts,bsd->btd', p, vh,
                             preferred_element_type=jnp.float32).astype(jnp.bfloat16))

    # Heads concatenated along the lane axis -> one K=C output-projection matmul
    # (accumulation stays inside the MXU; no per-head full-slab VPU adds).
    y = jnp.concatenate(ys, axis=-1).reshape(bb * T, C)                    # (bb*T, C) bf16
    out = jnp.dot(y, wp_ref[...], preferred_element_type=jnp.float32) + bp_ref[...]
    # resid_drop: identity at inference time.  Single contiguous lane-dense store.
    o_ref[...] = out.astype(o_ref.dtype)


def prepare_params(params, n_head):
    """One-time parameter preprocessing (hoisted out of the per-call wrapper):
    fuse Wq/Wk/Wv into one (C, 3C) matrix, fold the 1/sqrt(D) attention scale
    into Wq/bq, and cast matmul operands to bf16 (biases stay f32)."""
    wk, bk, wq, bq, wv, bv, wp, bp = params
    C = wq.shape[0]
    scale = 1.0 / math.sqrt(C // n_head)
    wqkv = jnp.concatenate([wq * scale, wk, wv], axis=1).astype(jnp.bfloat16)  # (C, 3C)
    bqkv = jnp.concatenate([bq * scale, bk, bv], axis=1).astype(jnp.float32)   # (1, 3C)
    return wqkv, bqkv, wp.astype(jnp.bfloat16), bp.astype(jnp.float32)


def _pick_batch_block(B, T, C, budget_bytes=12 << 20):
    """Largest divisor of B such that the grid has >= 2 steps (when B >= 2) and the
    per-step working set stays well under the most conservative scoped-VMEM default."""
    # Rough per-batch-row bytes: double-buffered x(f32)/out(bf16) blocks, f32+bf16
    # qkv temps, concatenated head outputs, mask + per-head score/exp/prob temps.
    per_row = (T * C * (2 * 4 + 2 * 2)          # x f32 + out bf16, 2x buffered
               + T * 3 * C * (4 + 2)            # qkv f32 + bf16
               + T * C * (4 + 2)                # head outputs / projection temps
               + T * T * 20)                    # mask + score/exp/prob f32 temps
    cap = max(1, budget_bytes // per_row)
    target = B if B < 2 else B // 2             # >= 2 grid steps when possible
    bb = max(1, min(cap, target))
    while bb > 1 and B % bb:
        bb -= 1
    if bb < B and (bb * T) % 8 != 0:            # f32 sub-block needs 8-row alignment
        bb = B
    return bb


def double_causal_attention(x, prepared, n_head, block_size=16, batch_block=None,
                            out_dtype=jnp.bfloat16):
    wqkv, bqkv, wp, bp = prepared
    B, T, C = x.shape
    assert C % n_head == 0 and T <= block_size

    bb = _pick_batch_block(B, T, C) if batch_block is None else batch_block
    assert B % bb == 0
    if bb < B:
        assert (bb * T) % 8 == 0, "f32 x sub-block needs bb*T % 8 == 0 (or bb == B)"
        if out_dtype == jnp.bfloat16 and (bb * T) % 16 != 0:
            out_dtype = jnp.float32             # bf16 sublane-packing fallback

    x_flat = x.reshape(B * T, C)                                           # f32, no extra copy

    kernel = functools.partial(_attn_kernel, bb=bb, T=T, C=C, n_head=n_head)
    out_flat = pl.pallas_call(
        kernel,
        out_shape=jax.ShapeDtypeStruct((B * T, C), out_dtype),
        grid=(B // bb,),
        in_specs=[
            pl.BlockSpec((bb * T, C), lambda i: (i, 0)),                   # x (batch-blocked)
            pl.BlockSpec((C, 3 * C), lambda i: (0, 0)),                    # fused Wqkv (bf16)
            pl.BlockSpec((1, 3 * C), lambda i: (0, 0)),                    # fused bqkv (f32)
            pl.BlockSpec((C, C), lambda i: (0, 0)),                        # Wproj (bf16)
            pl.BlockSpec((1, C), lambda i: (0, 0)),                        # bproj (f32)
        ],
        out_specs=pl.BlockSpec((bb * T, C), lambda i: (i, 0)),
        compiler_params=pltpu.CompilerParams(
            dimension_semantics=("parallel",),                             # megacore-shardable batch axis
            vmem_limit_bytes=32 * 1024 * 1024),
    )(x_flat, wqkv, bqkv, wp, bp)

    return out_flat.reshape(B, T, C)


def build_mask(block_size, T):
    # Module-spec mask: tril ones, plus mask[i, i+1] = 1 for odd i, sliced to T.
    m = np.tril(np.ones((block_size, block_size), dtype=np.float32))
    for i in range(block_size - 1):
        if i % 2 == 1:
            m[i, i + 1] = 1.0
    return jnp.asarray(m[:T, :T])


def reference_forward(x, params, mask, n_head):
    # Pure-JAX f32 reference mirroring the PyTorch module (eval mode).
    wk, bk, wq, bq, wv, bv, wp, bp = params
    B, T, C = x.shape
    D = C // n_head
    k = (x @ wk + bk[0]).reshape(B, T, n_head, D).transpose(0, 2, 1, 3)
    q = (x @ wq + bq[0]).reshape(B, T, n_head, D).transpose(0, 2, 1, 3)
    v = (x @ wv + bv[0]).reshape(B, T, n_head, D).transpose(0, 2, 1, 3)
    att = (q @ jnp.swapaxes(k, -2, -1)) * (1.0 / math.sqrt(D))
    att = jnp.where(mask[None, None] == 0, -jnp.inf, att)
    att = jax.nn.softmax(att, axis=-1)
    y = (att @ v).transpose(0, 2, 1, 3).reshape(B, T, C)
    return y @ wp + bp[0]


if __name__ == "__main__":
    # Small shapes consistent with the module: embed_dim % 8 == 0, T <= block_size.
    B, T, C = 4, 16, 64
    n_head = 8
    block_size = 16

    key = jax.random.PRNGKey(0)
    keys = jax.random.split(key, 9)
    scale = 0.05
    wk = scale * jax.random.normal(keys[0], (C, C), jnp.float32)
    bk = scale * jax.random.normal(keys[1], (1, C), jnp.float32)
    wq = scale * jax.random.normal(keys[2], (C, C), jnp.float32)
    bq = scale * jax.random.normal(keys[3], (1, C), jnp.float32)
    wv = scale * jax.random.normal(keys[4], (C, C), jnp.float32)
    bv = scale * jax.random.normal(keys[5], (1, C), jnp.float32)
    wp = scale * jax.random.normal(keys[6], (C, C), jnp.float32)
    bp = scale * jax.random.normal(keys[7], (1, C), jnp.float32)
    params = (wk, bk, wq, bq, wv, bv, wp, bp)

    x = jax.random.normal(keys[8], (B, T, C), jnp.float32)

    # One-time parameter prep (fusion / scale fold / bf16 casts) outside the call path.
    prepared = prepare_params(params, n_head)

    out = double_causal_attention(x, prepared, n_head, block_size=block_size)
    out = jax.block_until_ready(out)

    # Validate against the module-faithful f32 reference (mask built the PyTorch way).
    mask = build_mask(block_size, T)
    ref = reference_forward(x, params, mask, n_head)
    assert out.shape == (B, T, C)
    # bf16 matmul operands + bf16 output in the kernel -> loosened tolerance.
    out_f32 = np.asarray(out.astype(jnp.float32))
    assert np.allclose(out_f32, np.asarray(ref), atol=2e-2, rtol=2e-2)

    print("KERNEL_OK")
</pallas_src>

<mosaic_0001>
module attributes {stable_mosaic.version = 11 : i64} {
  func.func @_attn_kernel(%arg0: i32, %arg1: memref<32x64xf32, #tpu.memory_space<vmem>>, %arg2: memref<64x192xbf16, #tpu.memory_space<vmem>>, %arg3: memref<1x192xf32, #tpu.memory_space<vmem>>, %arg4: memref<64x64xbf16, #tpu.memory_space<vmem>>, %arg5: memref<1x64xf32, #tpu.memory_space<vmem>>, %arg6: memref<32x64xbf16, #tpu.memory_space<vmem>>) attributes {dimension_semantics = [#tpu.dimension_semantics<parallel>], iteration_bounds = array<i64: 2>, scalar_prefetch = 0 : i64, scratch_operands = 0 : i64, tpu.core_type = #tpu.core_type<tc>, window_params = [{transform_indices = @transform_0, window_bounds = array<i64: 32, 64>}, {pipeline_mode = #tpu.pipeline_mode<synchronous>, transform_indices = @transform_1, window_bounds = array<i64: 64, 192>}, {pipeline_mode = #tpu.pipeline_mode<synchronous>, transform_indices = @transform_2, window_bounds = array<i64: 1, 192>}, {pipeline_mode = #tpu.pipeline_mode<synchronous>, transform_indices = @transform_3, window_bounds = array<i64: 64, 64>}, {pipeline_mode = #tpu.pipeline_mode<synchronous>, transform_indices = @transform_4, window_bounds = array<i64: 1, 64>}, {transform_indices = @transform_5, window_bounds = array<i64: 32, 64>}]} {
    %c0 = arith.constant 0 : index
    %c0_0 = arith.constant 0 : index
    %0 = vector.load %arg1[%c0, %c0_0] : memref<32x64xf32, #tpu.memory_space<vmem>>, vector<32x64xf32>
    %1 = arith.truncf %0 : vector<32x64xf32> to vector<32x64xbf16>
    %c0_1 = arith.constant 0 : index
    %c0_2 = arith.constant 0 : index
    %2 = vector.load %arg2[%c0_1, %c0_2] : memref<64x192xbf16, #tpu.memory_space<vmem>>, vector<64x192xbf16>
    %cst = arith.constant dense<0.000000e+00> : vector<32x192xf32>
    %3 = tpu.matmul %1, %2, %cst {dimension_numbers = #tpu.dot_dimension_numbers<[1], [0], [0], [1], [0, 0, 1, 1], [], []>} : vector<32x64xbf16>, vector<64x192xbf16>, vector<32x192xf32> -> vector<32x192xf32>
    %c0_3 = arith.constant 0 : index
    %c0_4 = arith.constant 0 : index
    %4 = vector.load %arg3[%c0_3, %c0_4] : memref<1x192xf32, #tpu.memory_space<vmem>>, vector<1x192xf32>
    %5 = vector.broadcast %4 : vector<1x192xf32> to vector<32x192xf32>
    %6 = arith.addf %3, %5 : vector<32x192xf32>
    %7 = arith.truncf %6 : vector<32x192xf32> to vector<32x192xbf16>
    %8 = vector.shape_cast %7 : vector<32x192xbf16> to vector<2x16x192xbf16>
    %9 = tpu.iota {dimensions = array<i32: 0>} : vector<16x16xi32>
    %10 = tpu.iota {dimensions = array<i32: 1>} : vector<16x16xi32>
    %11 = arith.cmpi sle, %10, %9 : vector<16x16xi32>
    %c1_i32 = arith.constant 1 : i32
    %12 = vector.broadcast %c1_i32 : i32 to vector<16x16xi32>
    %13 = arith.andi %9, %12 : vector<16x16xi32>
    %c1_i32_5 = arith.constant 1 : i32
    %14 = vector.broadcast %c1_i32_5 : i32 to vector<16x16xi32>
    %15 = arith.cmpi eq, %13, %14 : vector<16x16xi32>
    %c1_i32_6 = arith.constant 1 : i32
    %16 = vector.broadcast %c1_i32_6 : i32 to vector<16x16xi32>
    %17 = arith.addi %9, %16 : vector<16x16xi32>
    %18 = arith.cmpi eq, %10, %17 : vector<16x16xi32>
    %19 = arith.andi %15, %18 : vector<16x16xi1>
    %20 = arith.ori %11, %19 : vector<16x16xi1>
    %cst_7 = arith.constant 0.000000e+00 : f32
    %cst_8 = arith.constant -1.000000e+30 : f32
    %21 = vector.broadcast %cst_7 : f32 to vector<16x16xf32>
    %22 = vector.broadcast %cst_8 : f32 to vector<16x16xf32>
    %23 = arith.select %20, %21, %22 : vector<16x16xi1>, vector<16x16xf32>
    %24 = vector.shape_cast %23 : vector<16x16xf32> to vector<1x16x16xf32>
    %25 = vector.shape_cast %24 : vector<1x16x16xf32> to vector<1x16x16xf32>
    %26 = vector.broadcast %25 : vector<1x16x16xf32> to vector<2x16x16xf32>
    %27 = vector.extract_strided_slice %8 {offsets = [0, 0, 0], sizes = [2, 16, 8], strides = [1, 1, 1]} : vector<2x16x192xbf16> to vector<2x16x8xbf16>
    %28 = vector.extract_strided_slice %8 {offsets = [0, 0, 64], sizes = [2, 16, 8], strides = [1, 1, 1]} : vector<2x16x192xbf16> to vector<2x16x8xbf16>
    %29 = vector.extract_strided_slice %8 {offsets = [0, 0, 128], sizes = [2, 16, 8], strides = [1, 1, 1]} : vector<2x16x192xbf16> to vector<2x16x8xbf16>
    "tpu.trace_start"() <{level = 10 : i32, message = "btd,bsd->bts"}> : () -> ()
    %cst_9 = arith.constant dense<0.000000e+00> : vector<2x16x16xf32>
    %30 = tpu.matmul %27, %28, %cst_9 {dimension_numbers = #tpu.dot_dimension_numbers<[2], [2], [1], [1], [0, 0, 0, 1, 1, 1], [0], [0]>} : vector<2x16x8xbf16>, vector<2x16x8xbf16>, vector<2x16x16xf32> -> vector<2x16x16xf32>
    "tpu.trace_stop"() : () -> ()
    %31 = arith.addf %30, %26 : vector<2x16x16xf32>
    %cst_10 = arith.constant dense<0xFF800000> : vector<2x16xf32>
    %32 = vector.multi_reduction <maximumf>, %31, %cst_10 [2] : vector<2x16x16xf32> to vector<2x16xf32>
    %33 = vector.shape_cast %32 : vector<2x16xf32> to vector<2x16x1xf32>
    %34 = vector.broadcast %33 : vector<2x16x1xf32> to vector<2x16x16xf32>
    %35 = arith.subf %31, %34 : vector<2x16x16xf32>
    %36 = math.exp %35 : vector<2x16x16xf32>
    %cst_11 = arith.constant dense<0.000000e+00> : vector<2x16xf32>
    %37 = vector.multi_reduction <add>, %36, %cst_11 [2] : vector<2x16x16xf32> to vector<2x16xf32>
    %38 = vector.shape_cast %37 : vector<2x16xf32> to vector<2x16x1xf32>
    %39 = tpu.reciprocal %38 {approx = true} : vector<2x16x1xf32> -> vector<2x16x1xf32>
    %40 = vector.broadcast %39 : vector<2x16x1xf32> to vector<2x16x16xf32>
    %41 = arith.mulf %36, %40 : vector<2x16x16xf32>
    %42 = arith.truncf %41 : vector<2x16x16xf32> to vector<2x16x16xbf16>
    "tpu.trace_start"() <{level = 10 : i32, message = "bts,bsd->btd"}> : () -> ()
    %cst_12 = arith.constant dense<0.000000e+00> : vector<2x16x8xf32>
    %43 = tpu.matmul %42, %29, %cst_12 {dimension_numbers = #tpu.dot_dimension_numbers<[2], [1], [1], [2], [0, 0, 0, 1, 1, 2], [0], [0]>} : vector<2x16x16xbf16>, vector<2x16x8xbf16>, vector<2x16x8xf32> -> vector<2x16x8xf32>
    "tpu.trace_stop"() : () -> ()
    %44 = arith.truncf %43 : vector<2x16x8xf32> to vector<2x16x8xbf16>
    %45 = vector.extract_strided_slice %8 {offsets = [0, 0, 8], sizes = [2, 16, 8], strides = [1, 1, 1]} : vector<2x16x192xbf16> to vector<2x16x8xbf16>
    %46 = vector.extract_strided_slice %8 {offsets = [0, 0, 72], sizes = [2, 16, 8], strides = [1, 1, 1]} : vector<2x16x192xbf16> to vector<2x16x8xbf16>
    %47 = vector.extract_strided_slice %8 {offsets = [0, 0, 136], sizes = [2, 16, 8], strides = [1, 1, 1]} : vector<2x16x192xbf16> to vector<2x16x8xbf16>
    "tpu.trace_start"() <{level = 10 : i32, message = "btd,bsd->bts"}> : () -> ()
    %cst_13 = arith.constant dense<0.000000e+00> : vector<2x16x16xf32>
    %48 = tpu.matmul %45, %46, %cst_13 {dimension_numbers = #tpu.dot_dimension_numbers<[2], [2], [1], [1], [0, 0, 0, 1, 1, 1], [0], [0]>} : vector<2x16x8xbf16>, vector<2x16x8xbf16>, vector<2x16x16xf32> -> vector<2x16x16xf32>
    "tpu.trace_stop"() : () -> ()
    %49 = arith.addf %48, %26 : vector<2x16x16xf32>
    %cst_14 = arith.constant dense<0xFF800000> : vector<2x16xf32>
    %50 = vector.multi_reduction <maximumf>, %49, %cst_14 [2] : vector<2x16x16xf32> to vector<2x16xf32>
    %51 = vector.shape_cast %50 : vector<2x16xf32> to vector<2x16x1xf32>
    %52 = vector.broadcast %51 : vector<2x16x1xf32> to vector<2x16x16xf32>
    %53 = arith.subf %49, %52 : vector<2x16x16xf32>
    %54 = math.exp %53 : vector<2x16x16xf32>
    %cst_15 = arith.constant dense<0.000000e+00> : vector<2x16xf32>
    %55 = vector.multi_reduction <add>, %54, %cst_15 [2] : vector<2x16x16xf32> to vector<2x16xf32>
    %56 = vector.shape_cast %55 : vector<2x16xf32> to vector<2x16x1xf32>
    %57 = tpu.reciprocal %56 {approx = true} : vector<2x16x1xf32> -> vector<2x16x1xf32>
    %58 = vector.broadcast %57 : vector<2x16x1xf32> to vector<2x16x16xf32>
    %59 = arith.mulf %54, %58 : vector<2x16x16xf32>
    %60 = arith.truncf %59 : vector<2x16x16xf32> to vector<2x16x16xbf16>
    "tpu.trace_start"() <{level = 10 : i32, message = "bts,bsd->btd"}> : () -> ()
    %cst_16 = arith.constant dense<0.000000e+00> : vector<2x16x8xf32>
    %61 = tpu.matmul %60, %47, %cst_16 {dimension_numbers = #tpu.dot_dimension_numbers<[2], [1], [1], [2], [0, 0, 0, 1, 1, 2], [0], [0]>} : vector<2x16x16xbf16>, vector<2x16x8xbf16>, vector<2x16x8xf32> -> vector<2x16x8xf32>
    "tpu.trace_stop"() : () -> ()
    %62 = arith.truncf %61 : vector<2x16x8xf32> to vector<2x16x8xbf16>
    %63 = vector.extract_strided_slice %8 {offsets = [0, 0, 16], sizes = [2, 16, 8], strides = [1, 1, 1]} : vector<2x16x192xbf16> to vector<2x16x8xbf16>
    %64 = vector.extract_strided_slice %8 {offsets = [0, 0, 80], sizes = [2, 16, 8], strides = [1, 1, 1]} : vector<2x16x192xbf16> to vector<2x16x8xbf16>
    %65 = vector.extract_strided_slice %8 {offsets = [0, 0, 144], sizes = [2, 16, 8], strides = [1, 1, 1]} : vector<2x16x192xbf16> to vector<2x16x8xbf16>
    "tpu.trace_start"() <{level = 10 : i32, message = "btd,bsd->bts"}> : () -> ()
    %cst_17 = arith.constant dense<0.000000e+00> : vector<2x16x16xf32>
    %66 = tpu.matmul %63, %64, %cst_17 {dimension_numbers = #tpu.dot_dimension_numbers<[2], [2], [1], [1], [0, 0, 0, 1, 1, 1], [0], [0]>} : vector<2x16x8xbf16>, vector<2x16x8xbf16>, vector<2x16x16xf32> -> vector<2x16x16xf32>
    "tpu.trace_stop"() : () -> ()
    %67 = arith.addf %66, %26 : vector<2x16x16xf32>
    %cst_18 = arith.constant dense<0xFF800000> : vector<2x16xf32>
    %68 = vector.multi_reduction <maximumf>, %67, %cst_18 [2] : vector<2x16x16xf32> to vector<2x16xf32>
    %69 = vector.shape_cast %68 : vector<2x16xf32> to vector<2x16x1xf32>
    %70 = vector.broadcast %69 : vector<2x16x1xf32> to vector<2x16x16xf32>
    %71 = arith.subf %67, %70 : vector<2x16x16xf32>
    %72 = math.exp %71 : vector<2x16x16xf32>
    %cst_19 = arith.constant dense<0.000000e+00> : vector<2x16xf32>
    %73 = vector.multi_reduction <add>, %72, %cst_19 [2] : vector<2x16x16xf32> to vector<2x16xf32>
    %74 = vector.shape_cast %73 : vector<2x16xf32> to vector<2x16x1xf32>
    %75 = tpu.reciprocal %74 {approx = true} : vector<2x16x1xf32> -> vector<2x16x1xf32>
    %76 = vector.broadcast %75 : vector<2x16x1xf32> to vector<2x16x16xf32>
    %77 = arith.mulf %72, %76 : vector<2x16x16xf32>
    %78 = arith.truncf %77 : vector<2x16x16xf32> to vector<2x16x16xbf16>
    "tpu.trace_start"() <{level = 10 : i32, message = "bts,bsd->btd"}> : () -> ()
    %cst_20 = arith.constant dense<0.000000e+00> : vector<2x16x8xf32>
    %79 = tpu.matmul %78, %65, %cst_20 {dimension_numbers = #tpu.dot_dimension_numbers<[2], [1], [1], [2], [0, 0, 0, 1, 1, 2], [0], [0]>} : vector<2x16x16xbf16>, vector<2x16x8xbf16>, vector<2x16x8xf32> -> vector<2x16x8xf32>
    "tpu.trace_stop"() : () -> ()
    %80 = arith.truncf %79 : vector<2x16x8xf32> to vector<2x16x8xbf16>
    %81 = vector.extract_strided_slice %8 {offsets = [0, 0, 24], sizes = [2, 16, 8], strides = [1, 1, 1]} : vector<2x16x192xbf16> to vector<2x16x8xbf16>
    %82 = vector.extract_strided_slice %8 {offsets = [0, 0, 88], sizes = [2, 16, 8], strides = [1, 1, 1]} : vector<2x16x192xbf16> to vector<2x16x8xbf16>
    %83 = vector.extract_strided_slice %8 {offsets = [0, 0, 152], sizes = [2, 16, 8], strides = [1, 1, 1]} : vector<2x16x192xbf16> to vector<2x16x8xbf16>
    "tpu.trace_start"() <{level = 10 : i32, message = "btd,bsd->bts"}> : () -> ()
    %cst_21 = arith.constant dense<0.000000e+00> : vector<2x16x16xf32>
    %84 = tpu.matmul %81, %82, %cst_21 {dimension_numbers = #tpu.dot_dimension_numbers<[2], [2], [1], [1], [0, 0, 0, 1, 1, 1], [0], [0]>} : vector<2x16x8xbf16>, vector<2x16x8xbf16>, vector<2x16x16xf32> -> vector<2x16x16xf32>
    "tpu.trace_stop"() : () -> ()
    %85 = arith.addf %84, %26 : vector<2x16x16xf32>
    %cst_22 = arith.constant dense<0xFF800000> : vector<2x16xf32>
    %86 = vector.multi_reduction <maximumf>, %85, %cst_22 [2] : vector<2x16x16xf32> to vector<2x16xf32>
    %87 = vector.shape_cast %86 : vector<2x16xf32> to vector<2x16x1xf32>
    %88 = vector.broadcast %87 : vector<2x16x1xf32> to vector<2x16x16xf32>
    %89 = arith.subf %85, %88 : vector<2x16x16xf32>
    %90 = math.exp %89 : vector<2x16x16xf32>
    %cst_23 = arith.constant dense<0.000000e+00> : vector<2x16xf32>
    %91 = vector.multi_reduction <add>, %90, %cst_23 [2] : vector<2x16x16xf32> to vector<2x16xf32>
    %92 = vector.shape_cast %91 : vector<2x16xf32> to vector<2x16x1xf32>
    %93 = tpu.reciprocal %92 {approx = true} : vector<2x16x1xf32> -> vector<2x16x1xf32>
    %94 = vector.broadcast %93 : vector<2x16x1xf32> to vector<2x16x16xf32>
    %95 = arith.mulf %90, %94 : vector<2x16x16xf32>
    %96 = arith.truncf %95 : vector<2x16x16xf32> to vector<2x16x16xbf16>
    "tpu.trace_start"() <{level = 10 : i32, message = "bts,bsd->btd"}> : () -> ()
    %cst_24 = arith.constant dense<0.000000e+00> : vector<2x16x8xf32>
    %97 = tpu.matmul %96, %83, %cst_24 {dimension_numbers = #tpu.dot_dimension_numbers<[2], [1], [1], [2], [0, 0, 0, 1, 1, 2], [0], [0]>} : vector<2x16x16xbf16>, vector<2x16x8xbf16>, vector<2x16x8xf32> -> vector<2x16x8xf32>
    "tpu.trace_stop"() : () -> ()
    %98 = arith.truncf %97 : vector<2x16x8xf32> to vector<2x16x8xbf16>
    %99 = vector.extract_strided_slice %8 {offsets = [0, 0, 32], sizes = [2, 16, 8], strides = [1, 1, 1]} : vector<2x16x192xbf16> to vector<2x16x8xbf16>
    %100 = vector.extract_strided_slice %8 {offsets = [0, 0, 96], sizes = [2, 16, 8], strides = [1, 1, 1]} : vector<2x16x192xbf16> to vector<2x16x8xbf16>
    %101 = vector.extract_strided_slice %8 {offsets = [0, 0, 160], sizes = [2, 16, 8], strides = [1, 1, 1]} : vector<2x16x192xbf16> to vector<2x16x8xbf16>
    "tpu.trace_start"() <{level = 10 : i32, message = "btd,bsd->bts"}> : () -> ()
    %cst_25 = arith.constant dense<0.000000e+00> : vector<2x16x16xf32>
    %102 = tpu.matmul %99, %100, %cst_25 {dimension_numbers = #tpu.dot_dimension_numbers<[2], [2], [1], [1], [0, 0, 0, 1, 1, 1], [0], [0]>} : vector<2x16x8xbf16>, vector<2x16x8xbf16>, vector<2x16x16xf32> -> vector<2x16x16xf32>
    "tpu.trace_stop"() : () -> ()
    %103 = arith.addf %102, %26 : vector<2x16x16xf32>
    %cst_26 = arith.constant dense<0xFF800000> : vector<2x16xf32>
    %104 = vector.multi_reduction <maximumf>, %103, %cst_26 [2] : vector<2x16x16xf32> to vector<2x16xf32>
    %105 = vector.shape_cast %104 : vector<2x16xf32> to vector<2x16x1xf32>
    %106 = vector.broadcast %105 : vector<2x16x1xf32> to vector<2x16x16xf32>
    %107 = arith.subf %103, %106 : vector<2x16x16xf32>
    %108 = math.exp %107 : vector<2x16x16xf32>
    %cst_27 = arith.constant dense<0.000000e+00> : vector<2x16xf32>
    %109 = vector.multi_reduction <add>, %108, %cst_27 [2] : vector<2x16x16xf32> to vector<2x16xf32>
    %110 = vector.shape_cast %109 : vector<2x16xf32> to vector<2x16x1xf32>
    %111 = tpu.reciprocal %110 {approx = true} : vector<2x16x1xf32> -> vector<2x16x1xf32>
    %112 = vector.broadcast %111 : vector<2x16x1xf32> to vector<2x16x16xf32>
    %113 = arith.mulf %108, %112 : vector<2x16x16xf32>
    %114 = arith.truncf %113 : vector<2x16x16xf32> to vector<2x16x16xbf16>
    "tpu.trace_start"() <{level = 10 : i32, message = "bts,bsd->btd"}> : () -> ()
    %cst_28 = arith.constant dense<0.000000e+00> : vector<2x16x8xf32>
    %115 = tpu.matmul %114, %101, %cst_28 {dimension_numbers = #tpu.dot_dimension_numbers<[2], [1], [1], [2], [0, 0, 0, 1, 1, 2], [0], [0]>} : vector<2x16x16xbf16>, vector<2x16x8xbf16>, vector<2x16x8xf32> -> vector<2x16x8xf32>
    "tpu.trace_stop"() : () -> ()
    %116 = arith.truncf %115 : vector<2x16x8xf32> to vector<2x16x8xbf16>
    %117 = vector.extract_strided_slice %8 {offsets = [0, 0, 40], sizes = [2, 16, 8], strides = [1, 1, 1]} : vector<2x16x192xbf16> to vector<2x16x8xbf16>
    %118 = vector.extract_strided_slice %8 {offsets = [0, 0, 104], sizes = [2, 16, 8], strides = [1, 1, 1]} : vector<2x16x192xbf16> to vector<2x16x8xbf16>
    %119 = vector.extract_strided_slice %8 {offsets = [0, 0, 168], sizes = [2, 16, 8], strides = [1, 1, 1]} : vector<2x16x192xbf16> to vector<2x16x8xbf16>
    "tpu.trace_start"() <{level = 10 : i32, message = "btd,bsd->bts"}> : () -> ()
    %cst_29 = arith.constant dense<0.000000e+00> : vector<2x16x16xf32>
    %120 = tpu.matmul %117, %118, %cst_29 {dimension_numbers = #tpu.dot_dimension_numbers<[2], [2], [1], [1], [0, 0, 0, 1, 1, 1], [0], [0]>} : vector<2x16x8xbf16>, vector<2x16x8xbf16>, vector<2x16x16xf32> -> vector<2x16x16xf32>
    "tpu.trace_stop"() : () -> ()
    %121 = arith.addf %120, %26 : vector<2x16x16xf32>
    %cst_30 = arith.constant dense<0xFF800000> : vector<2x16xf32>
    %122 = vector.multi_reduction <maximumf>, %121, %cst_30 [2] : vector<2x16x16xf32> to vector<2x16xf32>
    %123 = vector.shape_cast %122 : vector<2x16xf32> to vector<2x16x1xf32>
    %124 = vector.broadcast %123 : vector<2x16x1xf32> to vector<2x16x16xf32>
    %125 = arith.subf %121, %124 : vector<2x16x16xf32>
    %126 = math.exp %125 : vector<2x16x16xf32>
    %cst_31 = arith.constant dense<0.000000e+00> : vector<2x16xf32>
    %127 = vector.multi_reduction <add>, %126, %cst_31 [2] : vector<2x16x16xf32> to vector<2x16xf32>
    %128 = vector.shape_cast %127 : vector<2x16xf32> to vector<2x16x1xf32>
    %129 = tpu.reciprocal %128 {approx = true} : vector<2x16x1xf32> -> vector<2x16x1xf32>
    %130 = vector.broadcast %129 : vector<2x16x1xf32> to vector<2x16x16xf32>
    %131 = arith.mulf %126, %130 : vector<2x16x16xf32>
    %132 = arith.truncf %131 : vector<2x16x16xf32> to vector<2x16x16xbf16>
    "tpu.trace_start"() <{level = 10 : i32, message = "bts,bsd->btd"}> : () -> ()
    %cst_32 = arith.constant dense<0.000000e+00> : vector<2x16x8xf32>
    %133 = tpu.matmul %132, %119, %cst_32 {dimension_numbers = #tpu.dot_dimension_numbers<[2], [1], [1], [2], [0, 0, 0, 1, 1, 2], [0], [0]>} : vector<2x16x16xbf16>, vector<2x16x8xbf16>, vector<2x16x8xf32> -> vector<2x16x8xf32>
    "tpu.trace_stop"() : () -> ()
    %134 = arith.truncf %133 : vector<2x16x8xf32> to vector<2x16x8xbf16>
    %135 = vector.extract_strided_slice %8 {offsets = [0, 0, 48], sizes = [2, 16, 8], strides = [1, 1, 1]} : vector<2x16x192xbf16> to vector<2x16x8xbf16>
    %136 = vector.extract_strided_slice %8 {offsets = [0, 0, 112], sizes = [2, 16, 8], strides = [1, 1, 1]} : vector<2x16x192xbf16> to vector<2x16x8xbf16>
    %137 = vector.extract_strided_slice %8 {offsets = [0, 0, 176], sizes = [2, 16, 8], strides = [1, 1, 1]} : vector<2x16x192xbf16> to vector<2x16x8xbf16>
    "tpu.trace_start"() <{level = 10 : i32, message = "btd,bsd->bts"}> : () -> ()
    %cst_33 = arith.constant dense<0.000000e+00> : vector<2x16x16xf32>
    %138 = tpu.matmul %135, %136, %cst_33 {dimension_numbers = #tpu.dot_dimension_numbers<[2], [2], [1], [1], [0, 0, 0, 1, 1, 1], [0], [0]>} : vector<2x16x8xbf16>, vector<2x16x8xbf16>, vector<2x16x16xf32> -> vector<2x16x16xf32>
    "tpu.trace_stop"() : () -> ()
    %139 = arith.addf %138, %26 : vector<2x16x16xf32>
    %cst_34 = arith.constant dense<0xFF800000> : vector<2x16xf32>
    %140 = vector.multi_reduction <maximumf>, %139, %cst_34 [2] : vector<2x16x16xf32> to vector<2x16xf32>
    %141 = vector.shape_cast %140 : vector<2x16xf32> to vector<2x16x1xf32>
    %142 = vector.broadcast %141 : vector<2x16x1xf32> to vector<2x16x16xf32>
    %143 = arith.subf %139, %142 : vector<2x16x16xf32>
    %144 = math.exp %143 : vector<2x16x16xf32>
    %cst_35 = arith.constant dense<0.000000e+00> : vector<2x16xf32>
    %145 = vector.multi_reduction <add>, %144, %cst_35 [2] : vector<2x16x16xf32> to vector<2x16xf32>
    %146 = vector.shape_cast %145 : vector<2x16xf32> to vector<2x16x1xf32>
    %147 = tpu.reciprocal %146 {approx = true} : vector<2x16x1xf32> -> vector<2x16x1xf32>
    %148 = vector.broadcast %147 : vector<2x16x1xf32> to vector<2x16x16xf32>
    %149 = arith.mulf %144, %148 : vector<2x16x16xf32>
    %150 = arith.truncf %149 : vector<2x16x16xf32> to vector<2x16x16xbf16>
    "tpu.trace_start"() <{level = 10 : i32, message = "bts,bsd->btd"}> : () -> ()
    %cst_36 = arith.constant dense<0.000000e+00> : vector<2x16x8xf32>
    %151 = tpu.matmul %150, %137, %cst_36 {dimension_numbers = #tpu.dot_dimension_numbers<[2], [1], [1], [2], [0, 0, 0, 1, 1, 2], [0], [0]>} : vector<2x16x16xbf16>, vector<2x16x8xbf16>, vector<2x16x8xf32> -> vector<2x16x8xf32>
    "tpu.trace_stop"() : () -> ()
    %152 = arith.truncf %151 : vector<2x16x8xf32> to vector<2x16x8xbf16>
    %153 = vector.extract_strided_slice %8 {offsets = [0, 0, 56], sizes = [2, 16, 8], strides = [1, 1, 1]} : vector<2x16x192xbf16> to vector<2x16x8xbf16>
    %154 = vector.extract_strided_slice %8 {offsets = [0, 0, 120], sizes = [2, 16, 8], strides = [1, 1, 1]} : vector<2x16x192xbf16> to vector<2x16x8xbf16>
    %155 = vector.extract_strided_slice %8 {offsets = [0, 0, 184], sizes = [2, 16, 8], strides = [1, 1, 1]} : vector<2x16x192xbf16> to vector<2x16x8xbf16>
    "tpu.trace_start"() <{level = 10 : i32, message = "btd,bsd->bts"}> : () -> ()
    %cst_37 = arith.constant dense<0.000000e+00> : vector<2x16x16xf32>
    %156 = tpu.matmul %153, %154, %cst_37 {dimension_numbers = #tpu.dot_dimension_numbers<[2], [2], [1], [1], [0, 0, 0, 1, 1, 1], [0], [0]>} : vector<2x16x8xbf16>, vector<2x16x8xbf16>, vector<2x16x16xf32> -> vector<2x16x16xf32>
    "tpu.trace_stop"() : () -> ()
    %157 = arith.addf %156, %26 : vector<2x16x16xf32>
    %cst_38 = arith.constant dense<0xFF800000> : vector<2x16xf32>
    %158 = vector.multi_reduction <maximumf>, %157, %cst_38 [2] : vector<2x16x16xf32> to vector<2x16xf32>
    %159 = vector.shape_cast %158 : vector<2x16xf32> to vector<2x16x1xf32>
    %160 = vector.broadcast %159 : vector<2x16x1xf32> to vector<2x16x16xf32>
    %161 = arith.subf %157, %160 : vector<2x16x16xf32>
    %162 = math.exp %161 : vector<2x16x16xf32>
    %cst_39 = arith.constant dense<0.000000e+00> : vector<2x16xf32>
    %163 = vector.multi_reduction <add>, %162, %cst_39 [2] : vector<2x16x16xf32> to vector<2x16xf32>
    %164 = vector.shape_cast %163 : vector<2x16xf32> to vector<2x16x1xf32>
    %165 = tpu.reciprocal %164 {approx = true} : vector<2x16x1xf32> -> vector<2x16x1xf32>
    %166 = vector.broadcast %165 : vector<2x16x1xf32> to vector<2x16x16xf32>
    %167 = arith.mulf %162, %166 : vector<2x16x16xf32>
    %168 = arith.truncf %167 : vector<2x16x16xf32> to vector<2x16x16xbf16>
    "tpu.trace_start"() <{level = 10 : i32, message = "bts,bsd->btd"}> : () -> ()
    %cst_40 = arith.constant dense<0.000000e+00> : vector<2x16x8xf32>
    %169 = tpu.matmul %168, %155, %cst_40 {dimension_numbers = #tpu.dot_dimension_numbers<[2], [1], [1], [2], [0, 0, 0, 1, 1, 2], [0], [0]>} : vector<2x16x16xbf16>, vector<2x16x8xbf16>, vector<2x16x8xf32> -> vector<2x16x8xf32>
    "tpu.trace_stop"() : () -> ()
    %170 = arith.truncf %169 : vector<2x16x8xf32> to vector<2x16x8xbf16>
    %171 = tpu.concatenate %44, %62, %80, %98, %116, %134, %152, %170 in 2 : vector<2x16x8xbf16>, vector<2x16x8xbf16>, vector<2x16x8xbf16>, vector<2x16x8xbf16>, vector<2x16x8xbf16>, vector<2x16x8xbf16>, vector<2x16x8xbf16>, vector<2x16x8xbf16> -> vector<2x16x64xbf16>
    %172 = vector.shape_cast %171 : vector<2x16x64xbf16> to vector<32x64xbf16>
    %c0_41 = arith.constant 0 : index
    %c0_42 = arith.constant 0 : index
    %173 = vector.load %arg4[%c0_41, %c0_42] : memref<64x64xbf16, #tpu.memory_space<vmem>>, vector<64x64xbf16>
    %cst_43 = arith.constant dense<0.000000e+00> : vector<32x64xf32>
    %174 = tpu.matmul %172, %173, %cst_43 {dimension_numbers = #tpu.dot_dimension_numbers<[1], [0], [0], [1], [0, 0, 1, 1], [], []>} : vector<32x64xbf16>, vector<64x64xbf16>, vector<32x64xf32> -> vector<32x64xf32>
    %c0_44 = arith.constant 0 : index
    %c0_45 = arith.constant 0 : index
    %175 = vector.load %arg5[%c0_44, %c0_45] : memref<1x64xf32, #tpu.memory_space<vmem>>, vector<1x64xf32>
    %176 = vector.broadcast %175 : vector<1x64xf32> to vector<32x64xf32>
    %177 = arith.addf %174, %176 : vector<32x64xf32>
    %178 = arith.truncf %177 : vector<32x64xf32> to vector<32x64xbf16>
    %c0_46 = arith.constant 0 : index
    %c0_47 = arith.constant 0 : index
    %179 = vector.load %arg6[%c0_46, %c0_47] : memref<32x64xbf16, #tpu.memory_space<vmem>>, vector<32x64xbf16>
    tpu.vector_store %arg6[%c0_46, %c0_47], %178 {strides = array<i32>} : memref<32x64xbf16, #tpu.memory_space<vmem>>, vector<32x64xbf16>,
    return
  }
  func.func @transform_0(%arg0: i32) -> (i32, i32) {
    %c0_i32 = arith.constant 0 : i32
    %c0_i32_0 = arith.constant 0 : i32
    return %arg0, %c0_i32 : i32, i32
  }
  func.func @transform_1(%arg0: i32) -> (i32, i32) {
    %c0_i32 = arith.constant 0 : i32
    %c0_i32_0 = arith.constant 0 : i32
    %c0_i32_1 = arith.constant 0 : i32
    return %c0_i32, %c0_i32_0 : i32, i32
  }
  func.func @transform_2(%arg0: i32) -> (i32, i32) {
    %c0_i32 = arith.constant 0 : i32
    %c0_i32_0 = arith.constant 0 : i32
    %c0_i32_1 = arith.constant 0 : i32
    return %c0_i32, %c0_i32_0 : i32, i32
  }
  func.func @transform_3(%arg0: i32) -> (i32, i32) {
    %c0_i32 = arith.constant 0 : i32
    %c0_i32_0 = arith.constant 0 : i32
    %c0_i32_1 = arith.constant 0 : i32
    return %c0_i32, %c0_i32_0 : i32, i32
  }
  func.func @transform_4(%arg0: i32) -> (i32, i32) {
    %c0_i32 = arith.constant 0 : i32
    %c0_i32_0 = arith.constant 0 : i32
    %c0_i32_1 = arith.constant 0 : i32
    return %c0_i32, %c0_i32_0 : i32, i32
  }
  func.func @transform_5(%arg0: i32) -> (i32, i32) {
    %c0_i32 = arith.constant 0 : i32
    %c0_i32_0 = arith.constant 0 : i32
    return %arg0, %c0_i32 : i32, i32
  }
}

</mosaic_0001>

<llo_original>
// kernel: tpu_custom_call.1
$region0: #{tpu_custom_call.1}
  #allocation0 [shape = 'u32[]', space=smem, size = 0x4, offset = 0x4, fixed_abs, tag = 'smem constant byte address 0x4 - core index']
  #allocation1 [shape = 'u32[144,128]{1,0:T(1,128)}', space=vmem, size = 0x12000, scoped, tag = 'internal scratch']
  %s0 = inlined_call_operand.hbm [shape: f32[64,64], index: 0, kind: input, shape index: {}]
  %s1 = inlined_call_operand.hbm [shape: bf16[64,192], index: 1, kind: input, shape index: {}]
  %s2 = inlined_call_operand.vmem [shape: f32[1,192], index: 2, kind: input, shape index: {}]
  %s3 = inlined_call_operand.hbm [shape: bf16[64,64], index: 3, kind: input, shape index: {}]
  %s4 = inlined_call_operand.vmem [shape: f32[1,64], index: 4, kind: input, shape index: {}]
  %s5 = inlined_call_operand.hbm [shape: bf16[64,64], index: 5, kind: output, shape index: {}]
  %s6 = sld [smem:[#allocation0]]
  $region65: #{tpu_custom_call.1} parent=0
    _
  %s8 = ssub.s32 1, %s6
  %s9 = scalar_select 0, %s8, %s6
  $region1: #{tpu_custom_call.1} parent=0
    #allocation2 [shape = 'u8[32768]{0}', space=vmem, size = 0x8000, scoped, tag = 'input window, operand 0']
    #allocation3 [shape = 's32[2]{0}', space=sflag, size = 0x8, scoped, tag = 'scoped memory for tpu_custom_call.1']
    #allocation4 [shape = 's32[2]{0}', space=sflag, size = 0x8, scoped, tag = 'scoped memory for tpu_custom_call.1']
    #allocation5 [shape = 'u8[32768]{0}', space=vmem, size = 0x8000, scoped, tag = 'input window, operand 1, single buffered']
    #allocation6 [shape = 's32[1]{0}', space=sflag, size = 0x4, scoped, tag = 'scoped memory for tpu_custom_call.1']
    #allocation7 [shape = 'u8[16384]{0}', space=vmem, size = 0x4000, scoped, tag = 'input window, operand 3, single buffered']
    #allocation8 [shape = 'u8[16384]{0}', space=vmem, size = 0x4000, scoped, tag = 'output window, operand 0']
    %10 = vsyncpa [#allocation3], 0
    %s11 = scalar_lea.sflag [#allocation3], 1
    %12 = vsyncpa %s11, 0
    %13 = vsyncpa [#allocation6], 0
    %14 = vsyncpa [#allocation4], 0
    %s15 = scalar_lea.sflag [#allocation4], 1
    %16 = vsyncpa %s15, 0
    loop: start=0, step=1, limit=4
    $region2: #{tpu_custom_call.1} parent=1 // loop_pre_header
      _
    $region3: #{tpu_custom_call.1} parent=1 // loop_header
      %s18 = sphi 0, %s22
      %p19 = scmp.ge.s32.totalorder %s18, 4
      %s28 = sphi 0, %s30
      %s31 = sphi 0, %s28
      %s32 = sphi 0, %s31
      %s48 = sphi 0, %s32
      %s52 = sphi 0, %s52
      %s54 = sphi 0, %s52
      %s55 = sphi 0, %s54
      %s69 = sphi 0, %s55
      %s73 = sphi 0, %s73
      %s75 = sphi 0, %s73
      %s76 = sphi 0, %s75
      %s90 = sphi 0, %s76
      %s94 = sphi 0, %s94
      %s96 = sphi 0, %s94
      %s97 = sphi 0, %s96
      %s111 = sphi 0, %s97
      %s115 = sphi 0, %s115
      %s117 = sphi 0, %s115
      %s118 = sphi 0, %s117
      %s132 = sphi 0, %s118
      %s138 = sphi 0, %s140
      %s141 = sphi 0, %s138
      %s142 = sphi 0, %s141
      %s158 = sphi 0, %s142
    $region4: #{tpu_custom_call.1} parent=1 // loop_header_branch
      %21 = sbr.rel (%p19) target = $region8
    $region5: #{tpu_custom_call.1} parent=1 // loop_body
      %s23 = ssub.s32 %s18, 1
      %s24 = ssub.s32 %s18, 2
      %s25 = sadd.s32 %s18, 1
      %s26 = ssub.s32 %s18, %s25
      %p27 = scmp.eq.s32.totalorder %s26, 0
      %s29 = sadd.s32 %s28, 1
      %s30 = scalar_select %p27, %s28, %s29
      %p33 = pneg %p27
      %p34 = scmp.eq.s32.totalorder %s18, 1
      %p35 = por %p33, %p34
      %p36 = scmp.ne.s32.totalorder %s28, %s31
      %p37 = scmp.eq.s32.totalorder %s18, 0
      %p38 = por %p36, %p37
      %p39 = scmp.ne.s32.totalorder %s28, %s31
      %p40 = scmp.eq.s32.totalorder %s23, 1
      %p41 = por %p39, %p40
      %p42 = scmp.ne.s32.totalorder %s31, %s32
      %p43 = scmp.eq.s32.totalorder %s23, 0
      %p44 = por %p42, %p43
      %p45 = scmp.ne.s32.totalorder %s31, %s32
      %p46 = scmp.eq.s32.totalorder %s24, 1
      %p47 = por %p45, %p46
      %p49 = scmp.ne.s32.totalorder %s32, %s48
      %p50 = scmp.eq.s32.totalorder %s24, 0
      %p51 = por %p49, %p50
      %s53 = sadd.s32 %s52, 1
      %p56 = scmp.eq.s32.totalorder %s18, 1
      %p57 = scmp.ne.s32.totalorder %s52, %s54
      %p58 = scmp.eq.s32.totalorder %s18, 0
      %p59 = por %p57, %p58
      %p60 = scmp.ne.s32.totalorder %s52, %s54
      %p61 = scmp.eq.s32.totalorder %s23, 1
      %p62 = por %p60, %p61
      %p63 = scmp.ne.s32.totalorder %s54, %s55
      %p64 = scmp.eq.s32.totalorder %s23, 0
      %p65 = por %p63, %p64
      %p66 = scmp.ne.s32.totalorder %s54, %s55
      %p67 = scmp.eq.s32.totalorder %s24, 1
      %p68 = por %p66, %p67
      %p70 = scmp.ne.s32.totalorder %s55, %s69
      %p71 = scmp.eq.s32.totalorder %s24, 0
      %p72 = por %p70, %p71
      %s74 = sadd.s32 %s73, 1
      %p77 = scmp.eq.s32.totalorder %s18, 1
      %p78 = scmp.ne.s32.totalorder %s73, %s75
      %p79 = scmp.eq.s32.totalorder %s18, 0
      %p80 = por %p78, %p79
      %p81 = scmp.ne.s32.totalorder %s73, %s75
      %p82 = scmp.eq.s32.totalorder %s23, 1
      %p83 = por %p81, %p82
      %p84 = scmp.ne.s32.totalorder %s75, %s76
      %p85 = scmp.eq.s32.totalorder %s23, 0
      %p86 = por %p84, %p85
      %p87 = scmp.ne.s32.totalorder %s75, %s76
      %p88 = scmp.eq.s32.totalorder %s24, 1
      %p89 = por %p87, %p88
      %p91 = scmp.ne.s32.totalorder %s76, %s90
      %p92 = scmp.eq.s32.totalorder %s24, 0
      %p93 = por %p91, %p92
      %s95 = sadd.s32 %s94, 1
      %p98 = scmp.eq.s32.totalorder %s18, 1
      %p99 = scmp.ne.s32.totalorder %s94, %s96
      %p100 = scmp.eq.s32.totalorder %s18, 0
      %p101 = por %p99, %p100
      %p102 = scmp.ne.s32.totalorder %s94, %s96
      %p103 = scmp.eq.s32.totalorder %s23, 1
      %p104 = por %p102, %p103
      %p105 = scmp.ne.s32.totalorder %s96, %s97
      %p106 = scmp.eq.s32.totalorder %s23, 0
      %p107 = por %p105, %p106
      %p108 = scmp.ne.s32.totalorder %s96, %s97
      %p109 = scmp.eq.s32.totalorder %s24, 1
      %p110 = por %p108, %p109
      %p112 = scmp.ne.s32.totalorder %s97, %s111
      %p113 = scmp.eq.s32.totalorder %s24, 0
      %p114 = por %p112, %p113
      %s116 = sadd.s32 %s115, 1
      %p119 = scmp.eq.s32.totalorder %s18, 1
      %p120 = scmp.ne.s32.totalorder %s115, %s117
      %p121 = scmp.eq.s32.totalorder %s18, 0
      %p122 = por %p120, %p121
      %p123 = scmp.ne.s32.totalorder %s115, %s117
      %p124 = scmp.eq.s32.totalorder %s23, 1
      %p125 = por %p123, %p124
      %p126 = scmp.ne.s32.totalorder %s117, %s118
      %p127 = scmp.eq.s32.totalorder %s23, 0
      %p128 = por %p126, %p127
      %p129 = scmp.ne.s32.totalorder %s117, %s118
      %p130 = scmp.eq.s32.totalorder %s24, 1
      %p131 = por %p129, %p130
      %p133 = scmp.ne.s32.totalorder %s118, %s132
      %p134 = scmp.eq.s32.totalorder %s24, 0
      %p135 = por %p133, %p134
      %s136 = ssub.s32 %s18, %s25
      %p137 = scmp.eq.s32.totalorder %s136, 0
      %s139 = sadd.s32 %s138, 1
      %s140 = scalar_select %p137, %s138, %s139
      %p143 = pneg %p137
      %p144 = scmp.eq.s32.totalorder %s18, 1
      %p145 = por %p143, %p144
      %p146 = scmp.ne.s32.totalorder %s138, %s141
      %p147 = scmp.eq.s32.totalorder %s18, 0
      %p148 = por %p146, %p147
      %p149 = scmp.ne.s32.totalorder %s138, %s141
      %p150 = scmp.eq.s32.totalorder %s23, 1
      %p151 = por %p149, %p150
      %p152 = scmp.ne.s32.totalorder %s141, %s142
      %p153 = scmp.eq.s32.totalorder %s23, 0
      %p154 = por %p152, %p153
      %p155 = scmp.ne.s32.totalorder %s141, %s142
      %p156 = scmp.eq.s32.totalorder %s24, 1
      %p157 = por %p155, %p156
      %p159 = scmp.ne.s32.totalorder %s142, %s158
      %p160 = scmp.eq.s32.totalorder %s24, 0
      %p161 = por %p159, %p160
      %p162 = scmp.le.s32.totalorder 1, %s18
      %p163 = scmp.lt.s32.totalorder %s18, 3
      %p164 = pnand %p162, %p163
      %p165 = pneg %p164
      // Predicated region
      $region9: #{tpu_custom_call.1} parent=5 // pred_check
        _
      $region10: #{tpu_custom_call.1} parent=5 // pred_check_branch
        %167 = sbr.rel (%p164) target = $region12
      $region11: #{tpu_custom_call.1} parent=5 // pred_region
        %s168 = ssub.s32 %s18, 1
        // Predicated region
        $region13: #{tpu_custom_call.1} parent=11 // pred_check
          %p169 = pneg %p65
        $region14: #{tpu_custom_call.1} parent=11 // pred_check_branch
          %171 = sbr.rel (%p169) target = $region16
        $region15: #{tpu_custom_call.1} parent=11 // pred_region
          %s173 = ssub.s32 1024, 1024
          %174 = vsyncadd [#allocation6], %s173
          %s175 = sshll.u32 [#allocation5], 4
          %s176 = int_to_ptr.vmem [resolvable:$true] %s175
          %181 = dma.hbm_to_vmem [thread:$0]  %s1, 1024, %s176, [#allocation6], 128, 128, 8
        $region16: #{tpu_custom_call.1} parent=11 // pred_fallthru
          _
        // Predicated region
        $region17: #{tpu_custom_call.1} parent=11 // pred_check
          %p182 = pneg %p86
        $region18: #{tpu_custom_call.1} parent=11 // pred_check_branch
          %184 = sbr.rel (%p182) target = $region20
        $region19: #{tpu_custom_call.1} parent=11 // pred_region
          _
        $region20: #{tpu_custom_call.1} parent=11 // pred_fallthru
          _
        // Predicated region
        $region21: #{tpu_custom_call.1} parent=11 // pred_check
          %p185 = pneg %p107
        $region22: #{tpu_custom_call.1} parent=11 // pred_check_branch
          %187 = sbr.rel (%p185) target = $region24
        $region23: #{tpu_custom_call.1} parent=11 // pred_region
          %s189 = ssub.s32 512, 512
          %190 = vsyncadd [#allocation6], %s189
          %s191 = sshll.u32 [#allocation7], 4
          %s192 = int_to_ptr.vmem [resolvable:$true] %s191
          %197 = dma.hbm_to_vmem [thread:$0]  %s3, 512, %s192, [#allocation6], 64, 64, 4
        $region24: #{tpu_custom_call.1} parent=11 // pred_fallthru
          _
        // Predicated region
        $region25: #{tpu_custom_call.1} parent=11 // pred_check
          %p198 = pneg %p128
        $region26: #{tpu_custom_call.1} parent=11 // pred_check_branch
          %200 = sbr.rel (%p198) target = $region28
        $region27: #{tpu_custom_call.1} parent=11 // pred_region
          _
        $region28: #{tpu_custom_call.1} parent=11 // pred_fallthru
          _
      $region12: #{tpu_custom_call.1} parent=5 // pred_fallthru
        _
      %p201 = scmp.lt.s32.totalorder %s18, 2
      // Predicated region
      $region29: #{tpu_custom_call.1} parent=5 // pred_check
        %p202 = pneg %p201
      $region30: #{tpu_custom_call.1} parent=5 // pred_check_branch
        %204 = sbr.rel (%p202) target = $region32
      $region31: #{tpu_custom_call.1} parent=5 // pred_region
        // Predicated region
        $region33: #{tpu_custom_call.1} parent=31 // pred_check
          %p205 = pneg %p38
        $region34: #{tpu_custom_call.1} parent=31 // pred_check_branch
          %207 = sbr.rel (%p205) target = $region36
        $region35: #{tpu_custom_call.1} parent=31 // pred_region
          %s208 = sand.u32 %s28, 1
          %s209 = scalar_lea.sflag [#allocation3], %s208
          %s210 = sand.u32 %s28, 1
          %s211 = smul.addr %s210, 32
          %s212 = scalar_lea.vmem [#allocation2], %s211
          %s213 = smul.u32 4, %s18
          %s215 = ssub.s32 512, 512
          %216 = vsyncadd %s209, %s215
          %s217 = smul.addr %s213, 128
          %s218 = scalar_lea.hbm %s0, %s217
          %s219 = sshll.u32 %s212, 4
          %s220 = int_to_ptr.vmem [resolvable:$true] %s219
          %225 = dma.hbm_to_vmem [thread:$0]  %s218, 512, %s220, %s209, 128, 128, 8
        $region36: #{tpu_custom_call.1} parent=31 // pred_fallthru
          _
      $region32: #{tpu_custom_call.1} parent=5 // pred_fallthru
        _
      %p226 = scmp.le.s32.totalorder 1, %s18
      %p227 = scmp.lt.s32.totalorder %s18, 3
      %p228 = pnand %p226, %p227
      %p229 = pneg %p228
      // Predicated region
      $region37: #{tpu_custom_call.1} parent=5 // pred_check
        _
      $region38: #{tpu_custom_call.1} parent=5 // pred_check_branch
        %231 = sbr.rel (%p228) target = $region40
      $region39: #{tpu_custom_call.1} parent=5 // pred_region
        %s232 = ssub.s32 %s18, 1
        %s233 = sand.u32 %s31, 1
        %s234 = scalar_lea.sflag [#allocation3], %s233
        %s235 = sand.u32 %s31, 1
        %s236 = smul.addr %s235, 32
        %s237 = scalar_lea.vmem [#allocation2], %s236
        // Predicated region
        $region41: #{tpu_custom_call.1} parent=39 // pred_check
          %p238 = pneg %p44
        $region42: #{tpu_custom_call.1} parent=39 // pred_check_branch
          %240 = sbr.rel (%p238) target = $region44
        $region43: #{tpu_custom_call.1} parent=39 // pred_region
          %241 = dma.done %s234, 512
        $region44: #{tpu_custom_call.1} parent=39 // pred_fallthru
          _
        // Predicated region
        $region45: #{tpu_custom_call.1} parent=39 // pred_check
          %p242 = pneg %p65
        $region46: #{tpu_custom_call.1} parent=39 // pred_check_branch
          %244 = sbr.rel (%p242) target = $region48
        $region47: #{tpu_custom_call.1} parent=39 // pred_region
          %245 = dma.done [#allocation6], 1024
        $region48: #{tpu_custom_call.1} parent=39 // pred_fallthru
          _
        // Predicated region
        $region49: #{tpu_custom_call.1} parent=39 // pred_check
          %p246 = pneg %p107
        $region50: #{tpu_custom_call.1} parent=39 // pred_check_branch
          %248 = sbr.rel (%p246) target = $region52
        $region51: #{tpu_custom_call.1} parent=39 // pred_region
          %249 = dma.done [#allocation6], 512
        $region52: #{tpu_custom_call.1} parent=39 // pred_fallthru
          _
        %s250 = sand.u32 %s31, 1
        %s251 = scalar_lea.sflag [#allocation3], %s250
        %s252 = sand.u32 %s31, 1
        %s253 = smul.addr %s252, 32
        %s254 = scalar_lea.vmem [#allocation2], %s253
        %p255 = pneg %p44
        %p256 = pneg %p41
        %p257 = pneg %p65
        %p258 = pneg %p62
        %p259 = pneg %p86
        %p260 = pneg %p83
        %p261 = pneg %p107
        %p262 = pneg %p104
        %p263 = pneg %p128
        %p264 = pneg %p125
        %p265 = pneg %p154
        %p266 = pneg %p151
        %s267 = sand.u32 %s141, 1
        %s268 = scalar_lea.sflag [#allocation4], %s267
        %s269 = sand.u32 %s141, 1
        %s270 = smul.addr %s269, 16
        %s271 = scalar_lea.vmem [#allocation8], %s270
        %s272 = smul.u32 4, %s23
        %s273 = smul.u32 4, %s23
        %v275 = vld [vmem:[%s237] sm:$0xff]
        %v276 = vld [vmem:[%s237 + $0x8] sm:$0xff]
        %v277 = vld [vmem:[%s237 + $0x10] sm:$0xff]
        %v278 = vld [vmem:[%s237 + $0x18] sm:$0xff]
        %v279 = vpack.c.bf16 %v276, %v275
        %v280 = vpack.c.bf16 %v278, %v277
        %v281 = vld [vmem:[#allocation5] sm:$0xff]
        %v282 = vld [vmem:[#allocation5 + $0x8] sm:$0xff]
        %v283 = vld [vmem:[#allocation5 + $0x10] sm:$0xff]
        %v284 = vld [vmem:[#allocation5 + $0x18] sm:$0xff]
        %v285 = vld [vmem:[#allocation5 + $0x20] sm:$0xff]
        %v286 = vld [vmem:[#allocation5 + $0x28] sm:$0xff]
        %v287 = vld [vmem:[#allocation5 + $0x30] sm:$0xff]
        %v288 = vld [vmem:[#allocation5 + $0x38] sm:$0xff]
        %v289 = vld [vmem:[%s2] sm:$0x3]
        %v291 = vlaneseq
        %v292 = vshrl.u32 %v291, 7
        %v293 = vsub.s32 0, %v292
        %v294 = vrot.slane %v289, %v293
        %v295 = vlaneseq
        %v296 = vshrl.u32 %v295, 7
        %v297 = vsub.s32 1, %v296
        %v298 = vrot.slane %v289, %v297
        %v309 = vunpack.c.l.b16 %v281
        %v310 = vunpack.c.h.b16 %v281
        %v311 = vunpack.c.l.b16 %v282
        %v312 = vunpack.c.h.b16 %v282
        %v313 = vunpack.c.l.b16 %v283
        %v314 = vunpack.c.h.b16 %v283
        %v315 = vunpack.c.l.b16 %v284
        %v316 = vunpack.c.h.b16 %v284
        %v317 = vunpack.c.l.b16 %v285
        %v318 = vunpack.c.h.b16 %v285
        %v319 = vunpack.c.l.b16 %v286
        %v320 = vunpack.c.h.b16 %v286
        %v321 = vunpack.c.l.b16 %v287
        %v322 = vunpack.c.h.b16 %v287
        %v323 = vunpack.c.l.b16 %v288
        %v324 = vunpack.c.h.b16 %v288
        %v325 = vpack.c.b16 %v311, %v309
        %v326 = vpack.c.b16 %v312, %v310
        %v327 = vpack.c.b16 %v315, %v313
        %v328 = vpack.c.b16 %v316, %v314
        %v329 = vpack.c.b16 %v319, %v317
        %v330 = vpack.c.b16 %v320, %v318
        %v331 = vpack.c.b16 %v323, %v321
        %v332 = vpack.c.b16 %v324, %v322
        %vm341 = vcmask 523264
        %v343 = vsel %vm341, %v279, 0
        %v346 = vsel %vm341, %v280, 0
        %348 = vmatprep.subr.bf16.mxu0 0
        %349 = vmatpush1.bf16.msra.mxu0 0
        %350 = vmatprep.subr.bf16.mxu0 0
        %351 = vmatpush1.bf16.msra.mxu0 0
        %352 = vmatprep.subr.bf16.mxu0 0
        %353 = vmatpush1.bf16.msra.mxu0 0
        %354 = vmatprep.subr.bf16.mxu0 0
        %355 = vmatpush1.bf16.msra.mxu0 0
        %356 = vmatprep.subr.bf16.mxu0 %v332
        %357 = vmatpush1.bf16.msra.mxu0 %v331
        %358 = vmatprep.subr.bf16.mxu0 %v330
        %359 = vmatpush1.bf16.msra.mxu0 %v329
        %360 = vmatprep.subr.bf16.mxu0 %v328
        %361 = vmatpush1.bf16.msra.mxu0 %v327
        %362 = vmatprep.subr.bf16.mxu0 %v326
        %363 = vmatpush1.bf16.msra.mxu0 %v325
        %364 = vmatprep.subr.bf16.mxu0 0
        %365 = vmatpush2.bf16.msra.mxu0 0
        %366 = vmatprep.subr.bf16.mxu0 0
        %367 = vmatpush2.bf16.msra.mxu0 0
        %368 = vmatprep.subr.bf16.mxu0 0
        %369 = vmatpush2.bf16.msra.mxu0 0
        %370 = vmatprep.subr.bf16.mxu0 0
        %371 = vmatpush2.bf16.msra.mxu0 0
        %372 = vmatprep.subr.bf16.mxu0 0
        %373 = vmatpush2.bf16.msra.mxu0 0
        %374 = vmatprep.subr.bf16.mxu0 0
        %375 = vmatpush2.bf16.msra.mxu0 0
        %376 = vmatprep.subr.bf16.mxu0 0
        %377 = vmatpush2.bf16.msra.mxu0 0
        %378 = vmatprep.subr.bf16.mxu0 0
        %379 = vmatpush2.bf16.msra.mxu0 0
        %380 = vmatprep.mubr.bf16.mxu0 0
        %381 = vmatmul.mubr.bf16.gmra.mxu0 %v343
        %v382 = vpop.f32.mrf.mxu0
        %v383 = vadd.f32 %v294, %v382
        %v384 = vpop.f32.mrf.mxu0
        %v385 = vadd.f32 %v298, %v384
        %v386 = vpop.f32.mrf.mxu0
        %v387 = vadd.f32 %v294, %v386
        %v388 = vpop.f32.mrf.mxu0
        %v389 = vadd.f32 %v298, %v388
        %390 = vmatprep.mubr.bf16.mxu0 0
        %391 = vmatmul.mubr.bf16.gmra.mxu0 %v346
        %v392 = vpop.f32.mrf.mxu0
        %v393 = vadd.f32 %v294, %v392
        %v394 = vpop.f32.mrf.mxu0
        %v395 = vadd.f32 %v298, %v394
        %v396 = vpop.f32.mrf.mxu0
        %v397 = vadd.f32 %v294, %v396
        %v398 = vpop.f32.mrf.mxu0
        %v399 = vadd.f32 %v298, %v398
        %400 = vdwg.mxu0
        %v401 = vpack.c.bf16 %v387, %v383
        %v402 = vpack.c.bf16 %v389, %v385
        %v403 = vpack.c.bf16 %v397, %v393
        %v404 = vpack.c.bf16 %v399, %v395
        %v405 = vlaneseq
        %v406 = vshrl.u32 %v405, 7
        %v407 = vadd.s32 %v406, 8
        %v408 = vlaneseq
        %v409 = vand.u32 %v408, 127
        %vm410 = vcmp.le.s32.totalorder %v409, %v406
        %vm411 = vcmp.le.s32.totalorder %v409, %v407
        %v412 = vand.u32 %v406, 1
        %v413 = vand.u32 %v407, 1
        %vm414 = vcmp.eq.s32.totalorder %v412, 1
        %vm415 = vcmp.eq.s32.totalorder %v413, 1
        %v416 = vadd.s32 %v406, 1
        %v417 = vadd.s32 %v407, 1
        %vm418 = vcmp.eq.s32.totalorder %v409, %v416
        %vm419 = vcmp.eq.s32.totalorder %v409, %v417
        %vm420 = vmand %vm414, %vm418
        %vm421 = vmand %vm415, %vm419
        %vm422 = vmor %vm410, %vm420
        %vm423 = vmor %vm411, %vm421
        %v424 = vsel %vm422, 0.0, -1e+30
        %v425 = vsel %vm423, 0.0, -1e+30
        %427 = vrot.lane.b32.xlu0 %v401, 64
        %v428 = vpop.permute.xlu0 %427
        %vm429 = vcmask 64512
        %v431 = vsel %vm429, %v401, 0
        %v434 = vsel %vm429, %v428, 0
        %436 = vmatprep.subr.bf16.mxu0 0
        %437 = vmatpush1.bf16.xpose.msra.mxu0 0
        %438 = vmatprep.subr.bf16.mxu0 0
        %439 = vmatpush1.bf16.xpose.msra.mxu0 0
        %440 = vmatprep.subr.bf16.mxu0 0
        %441 = vmatpush1.bf16.xpose.msra.mxu0 0
        %442 = vmatprep.subr.bf16.mxu0 0
        %443 = vmatpush1.bf16.xpose.msra.mxu0 0
        %444 = vmatprep.subr.bf16.mxu0 0
        %445 = vmatpush1.bf16.xpose.msra.mxu0 0
        %446 = vmatprep.subr.bf16.mxu0 0
        %447 = vmatpush1.bf16.xpose.msra.mxu0 0
        %448 = vmatprep.subr.bf16.mxu0 0
        %449 = vmatpush1.bf16.xpose.msra.mxu0 0
        %450 = vmatprep.subr.bf16.mxu0 0
        %451 = vmatpush1.bf16.xpose.msra.mxu0 %v434
        %452 = vmatprep.subr.bf16.mxu0 0
        %453 = vmatpush2.bf16.xpose.msra.mxu0 0
        %454 = vmatprep.subr.bf16.mxu0 0
        %455 = vmatpush2.bf16.xpose.msra.mxu0 0
        %456 = vmatprep.subr.bf16.mxu0 0
        %457 = vmatpush2.bf16.xpose.msra.mxu0 0
        %458 = vmatprep.subr.bf16.mxu0 0
        %459 = vmatpush2.bf16.xpose.msra.mxu0 0
        %460 = vmatprep.subr.bf16.mxu0 0
        %461 = vmatpush2.bf16.xpose.msra.mxu0 0
        %462 = vmatprep.subr.bf16.mxu0 0
        %463 = vmatpush2.bf16.xpose.msra.mxu0 0
        %464 = vmatprep.subr.bf16.mxu0 0
        %465 = vmatpush2.bf16.xpose.msra.mxu0 0
        %466 = vmatprep.subr.bf16.mxu0 0
        %467 = vmatpush2.bf16.xpose.msra.mxu0 0
        %468 = vmatprep.mubr.bf16.mxu0 0
        %469 = vmatmul.mubr.bf16.gmra.mxu0 %v431
        %v470 = vpop.f32.mrf.mxu0
        %v471 = vadd.f32 %v424, %v470
        %v472 = vpop.f32.mrf.mxu0
        %v473 = vpop.f32.mrf.mxu0
        %v474 = vadd.f32 %v425, %v473
        %v475 = vpop.f32.mrf.mxu0
        %476 = vdwg.mxu0
        %478 = vrot.lane.b32.xlu0 %v403, 64
        %v479 = vpop.permute.xlu0 %478
        %v481 = vsel %vm429, %v403, 0
        %v484 = vsel %vm429, %v479, 0
        %486 = vmatprep.subr.bf16.mxu0 0
        %487 = vmatpush1.bf16.xpose.msra.mxu0 0
        %488 = vmatprep.subr.bf16.mxu0 0
        %489 = vmatpush1.bf16.xpose.msra.mxu0 0
        %490 = vmatprep.subr.bf16.mxu0 0
        %491 = vmatpush1.bf16.xpose.msra.mxu0 0
        %492 = vmatprep.subr.bf16.mxu0 0
        %493 = vmatpush1.bf16.xpose.msra.mxu0 0
        %494 = vmatprep.subr.bf16.mxu0 0
        %495 = vmatpush1.bf16.xpose.msra.mxu0 0
        %496 = vmatprep.subr.bf16.mxu0 0
        %497 = vmatpush1.bf16.xpose.msra.mxu0 0
        %498 = vmatprep.subr.bf16.mxu0 0
        %499 = vmatpush1.bf16.xpose.msra.mxu0 0
        %500 = vmatprep.subr.bf16.mxu0 0
        %501 = vmatpush1.bf16.xpose.msra.mxu0 %v484
        %502 = vmatprep.subr.bf16.mxu0 0
        %503 = vmatpush2.bf16.xpose.msra.mxu0 0
        %504 = vmatprep.subr.bf16.mxu0 0
        %505 = vmatpush2.bf16.xpose.msra.mxu0 0
        %506 = vmatprep.subr.bf16.mxu0 0
        %507 = vmatpush2.bf16.xpose.msra.mxu0 0
        %508 = vmatprep.subr.bf16.mxu0 0
        %509 = vmatpush2.bf16.xpose.msra.mxu0 0
        %510 = vmatprep.subr.bf16.mxu0 0
        %511 = vmatpush2.bf16.xpose.msra.mxu0 0
        %512 = vmatprep.subr.bf16.mxu0 0
        %513 = vmatpush2.bf16.xpose.msra.mxu0 0
        %514 = vmatprep.subr.bf16.mxu0 0
        %515 = vmatpush2.bf16.xpose.msra.mxu0 0
        %516 = vmatprep.subr.bf16.mxu0 0
        %517 = vmatpush2.bf16.xpose.msra.mxu0 0
        %518 = vmatprep.mubr.bf16.mxu0 0
        %519 = vmatmul.mubr.bf16.gmra.mxu0 %v481
        %v520 = vpop.f32.mrf.mxu0
        %v521 = vadd.f32 %v424, %v520
        %v522 = vpop.f32.mrf.mxu0
        %v523 = vpop.f32.mrf.mxu0
        %v524 = vadd.f32 %v425, %v523
        %v525 = vpop.f32.mrf.mxu0
        %526 = vdwg.mxu0
        %vm527 = vcmask 130048
        %v528 = vsel %vm527, %v471, -inf
        %529 = vmax.xlane.f32.xlu0 %v528
        %v530 = vpop.xlane.xlu0 %529
        %v531 = vsel %vm527, %v474, -inf
        %532 = vmax.xlane.f32.xlu0 %v531
        %v533 = vpop.xlane.xlu0 %532
        %v534 = vsel %vm527, %v521, -inf
        %535 = vmax.xlane.f32.xlu0 %v534
        %v536 = vpop.xlane.xlu0 %535
        %v537 = vsel %vm527, %v524, -inf
        %538 = vmax.xlane.f32.xlu0 %v537
        %v539 = vpop.xlane.xlu0 %538
        %v540 = vsub.f32 %v471, %v530
        %v541 = vsub.f32 %v474, %v533
        %v542 = vsub.f32 %v521, %v536
        %v543 = vsub.f32 %v524, %v539
        %v544 = vmul.f32 %v540, 1.442695
        %v545 = vpow.pop %v544
        %v546 = vmul.f32 %v541, 1.442695
        %v547 = vpow.pop %v546
        %v548 = vmul.f32 %v542, 1.442695
        %v549 = vpow.pop %v548
        %v550 = vmul.f32 %v543, 1.442695
        %v551 = vpow.pop %v550
        %v552 = vsel %vm527, %v545, 0.0
        %553 = vadd.xlane.f32.xlu0 %v552
        %v554 = vpop.xlane.xlu0 %553
        %v555 = vsel %vm527, %v547, 0.0
        %556 = vadd.xlane.f32.xlu0 %v555
        %v557 = vpop.xlane.xlu0 %556
        %v558 = vsel %vm527, %v549, 0.0
        %559 = vadd.xlane.f32.xlu0 %v558
        %v560 = vpop.xlane.xlu0 %559
        %v561 = vsel %vm527, %v551, 0.0
        %562 = vadd.xlane.f32.xlu0 %v561
        %v563 = vpop.xlane.xlu0 %562
        %v564 = vrcp.pop %v554
        %v565 = vrcp.pop %v557
        %v566 = vrcp.pop %v560
        %v567 = vrcp.pop %v563
        %v568 = vmul.f32 %v545, %v564
        %v569 = vmul.f32 %v547, %v565
        %v570 = vmul.f32 %v549, %v566
        %v571 = vmul.f32 %v551, %v567
        %v572 = vpack.c.bf16 %v569, %v568
        %v573 = vpack.c.bf16 %v571, %v570
        %v575 = vsel %vm527, %v572, 0
        %577 = vmatprep.subr.bf16.mxu0 0
        %578 = vmatpush1.bf16.msra.mxu0 0
        %579 = vmatprep.subr.bf16.mxu0 0
        %580 = vmatpush1.bf16.msra.mxu0 0
        %581 = vmatprep.subr.bf16.mxu0 0
        %582 = vmatpush1.bf16.msra.mxu0 0
        %583 = vmatprep.subr.bf16.mxu0 0
        %584 = vmatpush1.bf16.msra.mxu0 0
        %585 = vmatprep.subr.bf16.mxu0 0
        %586 = vmatpush1.bf16.msra.mxu0 0
        %587 = vmatprep.subr.bf16.mxu0 0
        %588 = vmatpush1.bf16.msra.mxu0 0
        %589 = vmatprep.subr.bf16.mxu0 0
        %590 = vmatpush1.bf16.msra.mxu0 0
        %591 = vmatprep.subr.bf16.mxu0 0
        %592 = vmatpush1.bf16.msra.mxu0 %v402
        %593 = vmatprep.subr.bf16.mxu0 0
        %594 = vmatpush2.bf16.msra.mxu0 0
        %595 = vmatprep.subr.bf16.mxu0 0
        %596 = vmatpush2.bf16.msra.mxu0 0
        %597 = vmatprep.subr.bf16.mxu0 0
        %598 = vmatpush2.bf16.msra.mxu0 0
        %599 = vmatprep.subr.bf16.mxu0 0
        %600 = vmatpush2.bf16.msra.mxu0 0
        %601 = vmatprep.subr.bf16.mxu0 0
        %602 = vmatpush2.bf16.msra.mxu0 0
        %603 = vmatprep.subr.bf16.mxu0 0
        %604 = vmatpush2.bf16.msra.mxu0 0
        %605 = vmatprep.subr.bf16.mxu0 0
        %606 = vmatpush2.bf16.msra.mxu0 0
        %607 = vmatprep.subr.bf16.mxu0 0
        %608 = vmatpush2.bf16.msra.mxu0 0
        %609 = vmatprep.mubr.bf16.mxu0 0
        %610 = vmatmul.mubr.bf16.gmra.mxu0 %v575
        %v611 = vpop.f32.mrf.mxu0
        %v612 = vadd.f32 0.0, %v611
        %v613 = vpop.f32.mrf.mxu0
        %v614 = vpop.f32.mrf.mxu0
        %v615 = vadd.f32 0.0, %v614
        %v616 = vpop.f32.mrf.mxu0
        %617 = vdwg.mxu0
        %v619 = vsel %vm527, %v573, 0
        %621 = vmatprep.subr.bf16.mxu0 0
        %622 = vmatpush1.bf16.msra.mxu0 0
        %623 = vmatprep.subr.bf16.mxu0 0
        %624 = vmatpush1.bf16.msra.mxu0 0
        %625 = vmatprep.subr.bf16.mxu0 0
        %626 = vmatpush1.bf16.msra.mxu0 0
        %627 = vmatprep.subr.bf16.mxu0 0
        %628 = vmatpush1.bf16.msra.mxu0 0
        %629 = vmatprep.subr.bf16.mxu0 0
        %630 = vmatpush1.bf16.msra.mxu0 0
        %631 = vmatprep.subr.bf16.mxu0 0
        %632 = vmatpush1.bf16.msra.mxu0 0
        %633 = vmatprep.subr.bf16.mxu0 0
        %634 = vmatpush1.bf16.msra.mxu0 0
        %635 = vmatprep.subr.bf16.mxu0 0
        %636 = vmatpush1.bf16.msra.mxu0 %v404
        %637 = vmatprep.subr.bf16.mxu0 0
        %638 = vmatpush2.bf16.msra.mxu0 0
        %639 = vmatprep.subr.bf16.mxu0 0
        %640 = vmatpush2.bf16.msra.mxu0 0
        %641 = vmatprep.subr.bf16.mxu0 0
        %642 = vmatpush2.bf16.msra.mxu0 0
        %643 = vmatprep.subr.bf16.mxu0 0
        %644 = vmatpush2.bf16.msra.mxu0 0
        %645 = vmatprep.subr.bf16.mxu0 0
        %646 = vmatpush2.bf16.msra.mxu0 0
        %647 = vmatprep.subr.bf16.mxu0 0
        %648 = vmatpush2.bf16.msra.mxu0 0
        %649 = vmatprep.subr.bf16.mxu0 0
        %650 = vmatpush2.bf16.msra.mxu0 0
        %651 = vmatprep.subr.bf16.mxu0 0
        %652 = vmatpush2.bf16.msra.mxu0 0
        %653 = vmatprep.mubr.bf16.mxu0 0
        %654 = vmatmul.mubr.bf16.gmra.mxu0 %v619
        %v655 = vpop.f32.mrf.mxu0
        %v656 = vadd.f32 0.0, %v655
        %v657 = vpop.f32.mrf.mxu0
        %v658 = vpop.f32.mrf.mxu0
        %v659 = vadd.f32 0.0, %v658
        %v660 = vpop.f32.mrf.mxu0
        %661 = vdwg.mxu0
        %v662 = vpack.c.bf16 %v615, %v612
        %v663 = vpack.c.bf16 %v659, %v656
        %664 = vrot.lane.b32.xlu0 %v401, 120
        %v665 = vpop.permute.xlu0 %664
        %666 = vrot.lane.b32.xlu0 %v401, 56
        %v667 = vpop.permute.xlu0 %666
        %v669 = vsel %vm429, %v665, 0
        %v672 = vsel %vm429, %v667, 0
        %674 = vmatprep.subr.bf16.mxu0 0
        %675 = vmatpush1.bf16.xpose.msra.mxu0 0
        %676 = vmatprep.subr.bf16.mxu0 0
        %677 = vmatpush1.bf16.xpose.msra.mxu0 0
        %678 = vmatprep.subr.bf16.mxu0 0
        %679 = vmatpush1.bf16.xpose.msra.mxu0 0
        %680 = vmatprep.subr.bf16.mxu0 0
        %681 = vmatpush1.bf16.xpose.msra.mxu0 0
        %682 = vmatprep.subr.bf16.mxu0 0
        %683 = vmatpush1.bf16.xpose.msra.mxu0 0
        %684 = vmatprep.subr.bf16.mxu0 0
        %685 = vmatpush1.bf16.xpose.msra.mxu0 0
        %686 = vmatprep.subr.bf16.mxu0 0
        %687 = vmatpush1.bf16.xpose.msra.mxu0 0
        %688 = vmatprep.subr.bf16.mxu0 0
        %689 = vmatpush1.bf16.xpose.msra.mxu0 %v672
        %690 = vmatprep.subr.bf16.mxu0 0
        %691 = vmatpush2.bf16.xpose.msra.mxu0 0
        %692 = vmatprep.subr.bf16.mxu0 0
        %693 = vmatpush2.bf16.xpose.msra.mxu0 0
        %694 = vmatprep.subr.bf16.mxu0 0
        %695 = vmatpush2.bf16.xpose.msra.mxu0 0
        %696 = vmatprep.subr.bf16.mxu0 0
        %697 = vmatpush2.bf16.xpose.msra.mxu0 0
        %698 = vmatprep.subr.bf16.mxu0 0
        %699 = vmatpush2.bf16.xpose.msra.mxu0 0
        %700 = vmatprep.subr.bf16.mxu0 0
        %701 = vmatpush2.bf16.xpose.msra.mxu0 0
        %702 = vmatprep.subr.bf16.mxu0 0
        %703 = vmatpush2.bf16.xpose.msra.mxu0 0
        %704 = vmatprep.subr.bf16.mxu0 0
        %705 = vmatpush2.bf16.xpose.msra.mxu0 0
        %706 = vmatprep.mubr.bf16.mxu0 0
        %707 = vmatmul.mubr.bf16.gmra.mxu0 %v669
        %v708 = vpop.f32.mrf.mxu0
        %v709 = vadd.f32 %v424, %v708
        %v710 = vpop.f32.mrf.mxu0
        %v711 = vpop.f32.mrf.mxu0
        %v712 = vadd.f32 %v425, %v711
        %v713 = vpop.f32.mrf.mxu0
        %714 = vdwg.mxu0
        %715 = vrot.lane.b32.xlu0 %v403, 120
        %v716 = vpop.permute.xlu0 %715
        %717 = vrot.lane.b32.xlu0 %v403, 56
        %v718 = vpop.permute.xlu0 %717
        %v720 = vsel %vm429, %v716, 0
        %v723 = vsel %vm429, %v718, 0
        %725 = vmatprep.subr.bf16.mxu0 0
        %726 = vmatpush1.bf16.xpose.msra.mxu0 0
        %727 = vmatprep.subr.bf16.mxu0 0
        %728 = vmatpush1.bf16.xpose.msra.mxu0 0
        %729 = vmatprep.subr.bf16.mxu0 0
        %730 = vmatpush1.bf16.xpose.msra.mxu0 0
        %731 = vmatprep.subr.bf16.mxu0 0
        %732 = vmatpush1.bf16.xpose.msra.mxu0 0
        %733 = vmatprep.subr.bf16.mxu0 0
        %734 = vmatpush1.bf16.xpose.msra.mxu0 0
        %735 = vmatprep.subr.bf16.mxu0 0
        %736 = vmatpush1.bf16.xpose.msra.mxu0 0
        %737 = vmatprep.subr.bf16.mxu0 0
        %738 = vmatpush1.bf16.xpose.msra.mxu0 0
        %739 = vmatprep.subr.bf16.mxu0 0
        %740 = vmatpush1.bf16.xpose.msra.mxu0 %v723
        %741 = vmatprep.subr.bf16.mxu0 0
        %742 = vmatpush2.bf16.xpose.msra.mxu0 0
        %743 = vmatprep.subr.bf16.mxu0 0
        %744 = vmatpush2.bf16.xpose.msra.mxu0 0
        %745 = vmatprep.subr.bf16.mxu0 0
        %746 = vmatpush2.bf16.xpose.msra.mxu0 0
        %747 = vmatprep.subr.bf16.mxu0 0
        %748 = vmatpush2.bf16.xpose.msra.mxu0 0
        %749 = vmatprep.subr.bf16.mxu0 0
        %750 = vmatpush2.bf16.xpose.msra.mxu0 0
        %751 = vmatprep.subr.bf16.mxu0 0
        %752 = vmatpush2.bf16.xpose.msra.mxu0 0
        %753 = vmatprep.subr.bf16.mxu0 0
        %754 = vmatpush2.bf16.xpose.msra.mxu0 0
        %755 = vmatprep.subr.bf16.mxu0 0
        %756 = vmatpush2.bf16.xpose.msra.mxu0 0
        %757 = vmatprep.mubr.bf16.mxu0 0
        %758 = vmatmul.mubr.bf16.gmra.mxu0 %v720
        %v759 = vpop.f32.mrf.mxu0
        %v760 = vadd.f32 %v424, %v759
        %v761 = vpop.f32.mrf.mxu0
        %v762 = vpop.f32.mrf.mxu0
        %v763 = vadd.f32 %v425, %v762
        %v764 = vpop.f32.mrf.mxu0
        %765 = vdwg.mxu0
        %v766 = vsel %vm527, %v709, -inf
        %767 = vmax.xlane.f32.xlu0 %v766
        %v768 = vpop.xlane.xlu0 %767
        %v769 = vsel %vm527, %v712, -inf
        %770 = vmax.xlane.f32.xlu0 %v769
        %v771 = vpop.xlane.xlu0 %770
        %v772 = vsel %vm527, %v760, -inf
        %773 = vmax.xlane.f32.xlu0 %v772
        %v774 = vpop.xlane.xlu0 %773
        %v775 = vsel %vm527, %v763, -inf
        %776 = vmax.xlane.f32.xlu0 %v775
        %v777 = vpop.xlane.xlu0 %776
        %v778 = vsub.f32 %v709, %v768
        %v779 = vsub.f32 %v712, %v771
        %v780 = vsub.f32 %v760, %v774
        %v781 = vsub.f32 %v763, %v777
        %v782 = vmul.f32 %v778, 1.442695
        %v783 = vpow.pop %v782
        %v784 = vmul.f32 %v779, 1.442695
        %v785 = vpow.pop %v784
        %v786 = vmul.f32 %v780, 1.442695
        %v787 = vpow.pop %v786
        %v788 = vmul.f32 %v781, 1.442695
        %v789 = vpow.pop %v788
        %v790 = vsel %vm527, %v783, 0.0
        %791 = vadd.xlane.f32.xlu0 %v790
        %v792 = vpop.xlane.xlu0 %791
        %v793 = vsel %vm527, %v785, 0.0
        %794 = vadd.xlane.f32.xlu0 %v793
        %v795 = vpop.xlane.xlu0 %794
        %v796 = vsel %vm527, %v787, 0.0
        %797 = vadd.xlane.f32.xlu0 %v796
        %v798 = vpop.xlane.xlu0 %797
        %v799 = vsel %vm527, %v789, 0.0
        %800 = vadd.xlane.f32.xlu0 %v799
        %v801 = vpop.xlane.xlu0 %800
        %v802 = vrcp.pop %v792
        %v803 = vrcp.pop %v795
        %v804 = vrcp.pop %v798
        %v805 = vrcp.pop %v801
        %v806 = vmul.f32 %v783, %v802
        %v807 = vmul.f32 %v785, %v803
        %v808 = vmul.f32 %v787, %v804
        %v809 = vmul.f32 %v789, %v805
        %v810 = vpack.c.bf16 %v807, %v806
        %v811 = vpack.c.bf16 %v809, %v808
        %813 = vrot.lane.b32.xlu0 %v402, 120
        %v814 = vpop.permute.xlu0 %813
        %v817 = vsel %vm527, %v810, 0
        %819 = vmatprep.subr.bf16.mxu0 0
        %820 = vmatpush1.bf16.msra.mxu0 0
        %821 = vmatprep.subr.bf16.mxu0 0
        %822 = vmatpush1.bf16.msra.mxu0 0
        %823 = vmatprep.subr.bf16.mxu0 0
        %824 = vmatpush1.bf16.msra.mxu0 0
        %825 = vmatprep.subr.bf16.mxu0 0
        %826 = vmatpush1.bf16.msra.mxu0 0
        %827 = vmatprep.subr.bf16.mxu0 0
        %828 = vmatpush1.bf16.msra.mxu0 0
        %829 = vmatprep.subr.bf16.mxu0 0
        %830 = vmatpush1.bf16.msra.mxu0 0
        %831 = vmatprep.subr.bf16.mxu0 0
        %832 = vmatpush1.bf16.msra.mxu0 0
        %833 = vmatprep.subr.bf16.mxu0 0
        %834 = vmatpush1.bf16.msra.mxu0 %v814
        %835 = vmatprep.subr.bf16.mxu0 0
        %836 = vmatpush2.bf16.msra.mxu0 0
        %837 = vmatprep.subr.bf16.mxu0 0
        %838 = vmatpush2.bf16.msra.mxu0 0
        %839 = vmatprep.subr.bf16.mxu0 0
        %840 = vmatpush2.bf16.msra.mxu0 0
        %841 = vmatprep.subr.bf16.mxu0 0
        %842 = vmatpush2.bf16.msra.mxu0 0
        %843 = vmatprep.subr.bf16.mxu0 0
        %844 = vmatpush2.bf16.msra.mxu0 0
        %845 = vmatprep.subr.bf16.mxu0 0
        %846 = vmatpush2.bf16.msra.mxu0 0
        %847 = vmatprep.subr.bf16.mxu0 0
        %848 = vmatpush2.bf16.msra.mxu0 0
        %849 = vmatprep.subr.bf16.mxu0 0
        %850 = vmatpush2.bf16.msra.mxu0 0
        %851 = vmatprep.mubr.bf16.mxu0 0
        %852 = vmatmul.mubr.bf16.gmra.mxu0 %v817
        %v853 = vpop.f32.mrf.mxu0
        %v854 = vadd.f32 0.0, %v853
        %v855 = vpop.f32.mrf.mxu0
        %v856 = vpop.f32.mrf.mxu0
        %v857 = vadd.f32 0.0, %v856
        %v858 = vpop.f32.mrf.mxu0
        %859 = vdwg.mxu0
        %861 = vrot.lane.b32.xlu0 %v404, 120
        %v862 = vpop.permute.xlu0 %861
        %v865 = vsel %vm527, %v811, 0
        %867 = vmatprep.subr.bf16.mxu0 0
        %868 = vmatpush1.bf16.msra.mxu0 0
        %869 = vmatprep.subr.bf16.mxu0 0
        %870 = vmatpush1.bf16.msra.mxu0 0
        %871 = vmatprep.subr.bf16.mxu0 0
        %872 = vmatpush1.bf16.msra.mxu0 0
        %873 = vmatprep.subr.bf16.mxu0 0
        %874 = vmatpush1.bf16.msra.mxu0 0
        %875 = vmatprep.subr.bf16.mxu0 0
        %876 = vmatpush1.bf16.msra.mxu0 0
        %877 = vmatprep.subr.bf16.mxu0 0
        %878 = vmatpush1.bf16.msra.mxu0 0
        %879 = vmatprep.subr.bf16.mxu0 0
        %880 = vmatpush1.bf16.msra.mxu0 0
        %881 = vmatprep.subr.bf16.mxu0 0
        %882 = vmatpush1.bf16.msra.mxu0 %v862
        %883 = vmatprep.subr.bf16.mxu0 0
        %884 = vmatpush2.bf16.msra.mxu0 0
        %885 = vmatprep.subr.bf16.mxu0 0
        %886 = vmatpush2.bf16.msra.mxu0 0
        %887 = vmatprep.subr.bf16.mxu0 0
        %888 = vmatpush2.bf16.msra.mxu0 0
        %889 = vmatprep.subr.bf16.mxu0 0
        %890 = vmatpush2.bf16.msra.mxu0 0
        %891 = vmatprep.subr.bf16.mxu0 0
        %892 = vmatpush2.bf16.msra.mxu0 0
        %893 = vmatprep.subr.bf16.mxu0 0
        %894 = vmatpush2.bf16.msra.mxu0 0
        %895 = vmatprep.subr.bf16.mxu0 0
        %896 = vmatpush2.bf16.msra.mxu0 0
        %897 = vmatprep.subr.bf16.mxu0 0
        %898 = vmatpush2.bf16.msra.mxu0 0
        %899 = vmatprep.mubr.bf16.mxu0 0
        %900 = vmatmul.mubr.bf16.gmra.mxu0 %v865
        %v901 = vpop.f32.mrf.mxu0
        %v902 = vadd.f32 0.0, %v901
        %v903 = vpop.f32.mrf.mxu0
        %v904 = vpop.f32.mrf.mxu0
        %v905 = vadd.f32 0.0, %v904
        %v906 = vpop.f32.mrf.mxu0
        %907 = vdwg.mxu0
        %v908 = vpack.c.bf16 %v857, %v854
        %v909 = vpack.c.bf16 %v905, %v902
        %910 = vrot.lane.b32.xlu0 %v401, 112
        %v911 = vpop.permute.xlu0 %910
        %912 = vrot.lane.b32.xlu0 %v401, 48
        %v913 = vpop.permute.xlu0 %912
        %v915 = vsel %vm429, %v911, 0
        %v918 = vsel %vm429, %v913, 0
        %920 = vmatprep.subr.bf16.mxu0 0
        %921 = vmatpush1.bf16.xpose.msra.mxu0 0
        %922 = vmatprep.subr.bf16.mxu0 0
        %923 = vmatpush1.bf16.xpose.msra.mxu0 0
        %924 = vmatprep.subr.bf16.mxu0 0
        %925 = vmatpush1.bf16.xpose.msra.mxu0 0
        %926 = vmatprep.subr.bf16.mxu0 0
        %927 = vmatpush1.bf16.xpose.msra.mxu0 0
        %928 = vmatprep.subr.bf16.mxu0 0
        %929 = vmatpush1.bf16.xpose.msra.mxu0 0
        %930 = vmatprep.subr.bf16.mxu0 0
        %931 = vmatpush1.bf16.xpose.msra.mxu0 0
        %932 = vmatprep.subr.bf16.mxu0 0
        %933 = vmatpush1.bf16.xpose.msra.mxu0 0
        %934 = vmatprep.subr.bf16.mxu0 0
        %935 = vmatpush1.bf16.xpose.msra.mxu0 %v918
        %936 = vmatprep.subr.bf16.mxu0 0
        %937 = vmatpush2.bf16.xpose.msra.mxu0 0
        %938 = vmatprep.subr.bf16.mxu0 0
        %939 = vmatpush2.bf16.xpose.msra.mxu0 0
        %940 = vmatprep.subr.bf16.mxu0 0
        %941 = vmatpush2.bf16.xpose.msra.mxu0 0
        %942 = vmatprep.subr.bf16.mxu0 0
        %943 = vmatpush2.bf16.xpose.msra.mxu0 0
        %944 = vmatprep.subr.bf16.mxu0 0
        %945 = vmatpush2.bf16.xpose.msra.mxu0 0
        %946 = vmatprep.subr.bf16.mxu0 0
        %947 = vmatpush2.bf16.xpose.msra.mxu0 0
        %948 = vmatprep.subr.bf16.mxu0 0
        %949 = vmatpush2.bf16.xpose.msra.mxu0 0
        %950 = vmatprep.subr.bf16.mxu0 0
        %951 = vmatpush2.bf16.xpose.msra.mxu0 0
        %952 = vmatprep.mubr.bf16.mxu0 0
        %953 = vmatmul.mubr.bf16.gmra.mxu0 %v915
        %v954 = vpop.f32.mrf.mxu0
        %v955 = vadd.f32 %v424, %v954
        %v956 = vpop.f32.mrf.mxu0
        %v957 = vpop.f32.mrf.mxu0
        %v958 = vadd.f32 %v425, %v957
        %v959 = vpop.f32.mrf.mxu0
        %960 = vdwg.mxu0
        %961 = vrot.lane.b32.xlu0 %v403, 112
        %v962 = vpop.permute.xlu0 %961
        %963 = vrot.lane.b32.xlu0 %v403, 48
        %v964 = vpop.permute.xlu0 %963
        %v966 = vsel %vm429, %v962, 0
        %v969 = vsel %vm429, %v964, 0
        %971 = vmatprep.subr.bf16.mxu0 0
        %972 = vmatpush1.bf16.xpose.msra.mxu0 0
        %973 = vmatprep.subr.bf16.mxu0 0
        %974 = vmatpush1.bf16.xpose.msra.mxu0 0
        %975 = vmatprep.subr.bf16.mxu0 0
        %976 = vmatpush1.bf16.xpose.msra.mxu0 0
        %977 = vmatprep.subr.bf16.mxu0 0
        %978 = vmatpush1.bf16.xpose.msra.mxu0 0
        %979 = vmatprep.subr.bf16.mxu0 0
        %980 = vmatpush1.bf16.xpose.msra.mxu0 0
        %981 = vmatprep.subr.bf16.mxu0 0
        %982 = vmatpush1.bf16.xpose.msra.mxu0 0
        %983 = vmatprep.subr.bf16.mxu0 0
        %984 = vmatpush1.bf16.xpose.msra.mxu0 0
        %985 = vmatprep.subr.bf16.mxu0 0
        %986 = vmatpush1.bf16.xpose.msra.mxu0 %v969
        %987 = vmatprep.subr.bf16.mxu0 0
        %988 = vmatpush2.bf16.xpose.msra.mxu0 0
        %989 = vmatprep.subr.bf16.mxu0 0
        %990 = vmatpush2.bf16.xpose.msra.mxu0 0
        %991 = vmatprep.subr.bf16.mxu0 0
        %992 = vmatpush2.bf16.xpose.msra.mxu0 0
        %993 = vmatprep.subr.bf16.mxu0 0
        %994 = vmatpush2.bf16.xpose.msra.mxu0 0
        %995 = vmatprep.subr.bf16.mxu0 0
        %996 = vmatpush2.bf16.xpose.msra.mxu0 0
        %997 = vmatprep.subr.bf16.mxu0 0
        %998 = vmatpush2.bf16.xpose.msra.mxu0 0
        %999 = vmatprep.subr.bf16.mxu0 0
        %1000 = vmatpush2.bf16.xpose.msra.mxu0 0
        %1001 = vmatprep.subr.bf16.mxu0 0
        %1002 = vmatpush2.bf16.xpose.msra.mxu0 0
        %1003 = vmatprep.mubr.bf16.mxu0 0
        %1004 = vmatmul.mubr.bf16.gmra.mxu0 %v966
        %v1005 = vpop.f32.mrf.mxu0
        %v1006 = vadd.f32 %v424, %v1005
        %v1007 = vpop.f32.mrf.mxu0
        %v1008 = vpop.f32.mrf.mxu0
        %v1009 = vadd.f32 %v425, %v1008
        %v1010 = vpop.f32.mrf.mxu0
        %1011 = vdwg.mxu0
        %v1012 = vsel %vm527, %v955, -inf
        %1013 = vmax.xlane.f32.xlu0 %v1012
        %v1014 = vpop.xlane.xlu0 %1013
        %v1015 = vsel %vm527, %v958, -inf
        %1016 = vmax.xlane.f32.xlu0 %v1015
        %v1017 = vpop.xlane.xlu0 %1016
        %v1018 = vsel %vm527, %v1006, -inf
        %1019 = vmax.xlane.f32.xlu0 %v1018
        %v1020 = vpop.xlane.xlu0 %1019
        %v1021 = vsel %vm527, %v1009, -inf
        %1022 = vmax.xlane.f32.xlu0 %v1021
        %v1023 = vpop.xlane.xlu0 %1022
        %v1024 = vsub.f32 %v955, %v1014
        %v1025 = vsub.f32 %v958, %v1017
        %v1026 = vsub.f32 %v1006, %v1020
        %v1027 = vsub.f32 %v1009, %v1023
        %v1028 = vmul.f32 %v1024, 1.442695
        %v1029 = vpow.pop %v1028
        %v1030 = vmul.f32 %v1025, 1.442695
        %v1031 = vpow.pop %v1030
        %v1032 = vmul.f32 %v1026, 1.442695
        %v1033 = vpow.pop %v1032
        %v1034 = vmul.f32 %v1027, 1.442695
        %v1035 = vpow.pop %v1034
        %v1036 = vsel %vm527, %v1029, 0.0
        %1037 = vadd.xlane.f32.xlu0 %v1036
        %v1038 = vpop.xlane.xlu0 %1037
        %v1039 = vsel %vm527, %v1031, 0.0
        %1040 = vadd.xlane.f32.xlu0 %v1039
        %v1041 = vpop.xlane.xlu0 %1040
        %v1042 = vsel %vm527, %v1033, 0.0
        %1043 = vadd.xlane.f32.xlu0 %v1042
        %v1044 = vpop.xlane.xlu0 %1043
        %v1045 = vsel %vm527, %v1035, 0.0
        %1046 = vadd.xlane.f32.xlu0 %v1045
        %v1047 = vpop.xlane.xlu0 %1046
        %v1048 = vrcp.pop %v1038
        %v1049 = vrcp.pop %v1041
        %v1050 = vrcp.pop %v1044
        %v1051 = vrcp.pop %v1047
        %v1052 = vmul.f32 %v1029, %v1048
        %v1053 = vmul.f32 %v1031, %v1049
        %v1054 = vmul.f32 %v1033, %v1050
        %v1055 = vmul.f32 %v1035, %v1051
        %v1056 = vpack.c.bf16 %v1053, %v1052
        %v1057 = vpack.c.bf16 %v1055, %v1054
        %1058 = vrot.lane.b32.xlu0 %v402, 112
        %v1059 = vpop.permute.xlu0 %1058
        %v1062 = vsel %vm527, %v1056, 0
        %1064 = vmatprep.subr.bf16.mxu0 0
        %1065 = vmatpush1.bf16.msra.mxu0 0
        %1066 = vmatprep.subr.bf16.mxu0 0
        %1067 = vmatpush1.bf16.msra.mxu0 0
        %1068 = vmatprep.subr.bf16.mxu0 0
        %1069 = vmatpush1.bf16.msra.mxu0 0
        %1070 = vmatprep.subr.bf16.mxu0 0
        %1071 = vmatpush1.bf16.msra.mxu0 0
        %1072 = vmatprep.subr.bf16.mxu0 0
        %1073 = vmatpush1.bf16.msra.mxu0 0
        %1074 = vmatprep.subr.bf16.mxu0 0
        %1075 = vmatpush1.bf16.msra.mxu0 0
        %1076 = vmatprep.subr.bf16.mxu0 0
        %1077 = vmatpush1.bf16.msra.mxu0 0
        %1078 = vmatprep.subr.bf16.mxu0 0
        %1079 = vmatpush1.bf16.msra.mxu0 %v1059
        %1080 = vmatprep.subr.bf16.mxu0 0
        %1081 = vmatpush2.bf16.msra.mxu0 0
        %1082 = vmatprep.subr.bf16.mxu0 0
        %1083 = vmatpush2.bf16.msra.mxu0 0
        %1084 = vmatprep.subr.bf16.mxu0 0
        %1085 = vmatpush2.bf16.msra.mxu0 0
        %1086 = vmatprep.subr.bf16.mxu0 0
        %1087 = vmatpush2.bf16.msra.mxu0 0
        %1088 = vmatprep.subr.bf16.mxu0 0
        %1089 = vmatpush2.bf16.msra.mxu0 0
        %1090 = vmatprep.subr.bf16.mxu0 0
        %1091 = vmatpush2.bf16.msra.mxu0 0
        %1092 = vmatprep.subr.bf16.mxu0 0
        %1093 = vmatpush2.bf16.msra.mxu0 0
        %1094 = vmatprep.subr.bf16.mxu0 0
        %1095 = vmatpush2.bf16.msra.mxu0 0
        %1096 = vmatprep.mubr.bf16.mxu0 0
        %1097 = vmatmul.mubr.bf16.gmra.mxu0 %v1062
        %v1098 = vpop.f32.mrf.mxu0
        %v1099 = vadd.f32 0.0, %v1098
        %v1100 = vpop.f32.mrf.mxu0
        %v1101 = vpop.f32.mrf.mxu0
        %v1102 = vadd.f32 0.0, %v1101
        %v1103 = vpop.f32.mrf.mxu0
        %1104 = vdwg.mxu0
        %1105 = vrot.lane.b32.xlu0 %v404, 112
        %v1106 = vpop.permute.xlu0 %1105
        %v1109 = vsel %vm527, %v1057, 0
        %1111 = vmatprep.subr.bf16.mxu0 0
        %1112 = vmatpush1.bf16.msra.mxu0 0
        %1113 = vmatprep.subr.bf16.mxu0 0
        %1114 = vmatpush1.bf16.msra.mxu0 0
        %1115 = vmatprep.subr.bf16.mxu0 0
        %1116 = vmatpush1.bf16.msra.mxu0 0
        %1117 = vmatprep.subr.bf16.mxu0 0
        %1118 = vmatpush1.bf16.msra.mxu0 0
        %1119 = vmatprep.subr.bf16.mxu0 0
        %1120 = vmatpush1.bf16.msra.mxu0 0
        %1121 = vmatprep.subr.bf16.mxu0 0
        %1122 = vmatpush1.bf16.msra.mxu0 0
        %1123 = vmatprep.subr.bf16.mxu0 0
        %1124 = vmatpush1.bf16.msra.mxu0 0
        %1125 = vmatprep.subr.bf16.mxu0 0
        %1126 = vmatpush1.bf16.msra.mxu0 %v1106
        %1127 = vmatprep.subr.bf16.mxu0 0
        %1128 = vmatpush2.bf16.msra.mxu0 0
        %1129 = vmatprep.subr.bf16.mxu0 0
        %1130 = vmatpush2.bf16.msra.mxu0 0
        %1131 = vmatprep.subr.bf16.mxu0 0
        %1132 = vmatpush2.bf16.msra.mxu0 0
        %1133 = vmatprep.subr.bf16.mxu0 0
        %1134 = vmatpush2.bf16.msra.mxu0 0
        %1135 = vmatprep.subr.bf16.mxu0 0
        %1136 = vmatpush2.bf16.msra.mxu0 0
        %1137 = vmatprep.subr.bf16.mxu0 0
        %1138 = vmatpush2.bf16.msra.mxu0 0
        %1139 = vmatprep.subr.bf16.mxu0 0
        %1140 = vmatpush2.bf16.msra.mxu0 0
        %1141 = vmatprep.subr.bf16.mxu0 0
        %1142 = vmatpush2.bf16.msra.mxu0 0
        %1143 = vmatprep.mubr.bf16.mxu0 0
        %1144 = vmatmul.mubr.bf16.gmra.mxu0 %v1109
        %v1145 = vpop.f32.mrf.mxu0
        %v1146 = vadd.f32 0.0, %v1145
        %v1147 = vpop.f32.mrf.mxu0
        %v1148 = vpop.f32.mrf.mxu0
        %v1149 = vadd.f32 0.0, %v1148
        %v1150 = vpop.f32.mrf.mxu0
        %1151 = vdwg.mxu0
        %v1152 = vpack.c.bf16 %v1102, %v1099
        %v1153 = vpack.c.bf16 %v1149, %v1146
        %1154 = vrot.lane.b32.xlu0 %v401, 104
        %v1155 = vpop.permute.xlu0 %1154
        %1156 = vrot.lane.b32.xlu0 %v401, 40
        %v1157 = vpop.permute.xlu0 %1156
        %v1159 = vsel %vm429, %v1155, 0
        %v1162 = vsel %vm429, %v1157, 0
        %1164 = vmatprep.subr.bf16.mxu0 0
        %1165 = vmatpush1.bf16.xpose.msra.mxu0 0
        %1166 = vmatprep.subr.bf16.mxu0 0
        %1167 = vmatpush1.bf16.xpose.msra.mxu0 0
        %1168 = vmatprep.subr.bf16.mxu0 0
        %1169 = vmatpush1.bf16.xpose.msra.mxu0 0
        %1170 = vmatprep.subr.bf16.mxu0 0
        %1171 = vmatpush1.bf16.xpose.msra.mxu0 0
        %1172 = vmatprep.subr.bf16.mxu0 0
        %1173 = vmatpush1.bf16.xpose.msra.mxu0 0
        %1174 = vmatprep.subr.bf16.mxu0 0
        %1175 = vmatpush1.bf16.xpose.msra.mxu0 0
        %1176 = vmatprep.subr.bf16.mxu0 0
        %1177 = vmatpush1.bf16.xpose.msra.mxu0 0
        %1178 = vmatprep.subr.bf16.mxu0 0
        %1179 = vmatpush1.bf16.xpose.msra.mxu0 %v1162
        %1180 = vmatprep.subr.bf16.mxu0 0
        %1181 = vmatpush2.bf16.xpose.msra.mxu0 0
        %1182 = vmatprep.subr.bf16.mxu0 0
        %1183 = vmatpush2.bf16.xpose.msra.mxu0 0
        %1184 = vmatprep.subr.bf16.mxu0 0
        %1185 = vmatpush2.bf16.xpose.msra.mxu0 0
        %1186 = vmatprep.subr.bf16.mxu0 0
        %1187 = vmatpush2.bf16.xpose.msra.mxu0 0
        %1188 = vmatprep.subr.bf16.mxu0 0
        %1189 = vmatpush2.bf16.xpose.msra.mxu0 0
        %1190 = vmatprep.subr.bf16.mxu0 0
        %1191 = vmatpush2.bf16.xpose.msra.mxu0 0
        %1192 = vmatprep.subr.bf16.mxu0 0
        %1193 = vmatpush2.bf16.xpose.msra.mxu0 0
        %1194 = vmatprep.subr.bf16.mxu0 0
        %1195 = vmatpush2.bf16.xpose.msra.mxu0 0
        %1196 = vmatprep.mubr.bf16.mxu0 0
        %1197 = vmatmul.mubr.bf16.gmra.mxu0 %v1159
        %v1198 = vpop.f32.mrf.mxu0
        %v1199 = vadd.f32 %v424, %v1198
        %v1200 = vpop.f32.mrf.mxu0
        %v1201 = vpop.f32.mrf.mxu0
        %v1202 = vadd.f32 %v425, %v1201
        %v1203 = vpop.f32.mrf.mxu0
        %1204 = vdwg.mxu0
        %1205 = vrot.lane.b32.xlu0 %v403, 104
        %v1206 = vpop.permute.xlu0 %1205
        %1207 = vrot.lane.b32.xlu0 %v403, 40
        %v1208 = vpop.permute.xlu0 %1207
        %v1210 = vsel %vm429, %v1206, 0
        %v1213 = vsel %vm429, %v1208, 0
        %1215 = vmatprep.subr.bf16.mxu0 0
        %1216 = vmatpush1.bf16.xpose.msra.mxu0 0
        %1217 = vmatprep.subr.bf16.mxu0 0
        %1218 = vmatpush1.bf16.xpose.msra.mxu0 0
        %1219 = vmatprep.subr.bf16.mxu0 0
        %1220 = vmatpush1.bf16.xpose.msra.mxu0 0
        %1221 = vmatprep.subr.bf16.mxu0 0
        %1222 = vmatpush1.bf16.xpose.msra.mxu0 0
        %1223 = vmatprep.subr.bf16.mxu0 0
        %1224 = vmatpush1.bf16.xpose.msra.mxu0 0
        %1225 = vmatprep.subr.bf16.mxu0 0
        %1226 = vmatpush1.bf16.xpose.msra.mxu0 0
        %1227 = vmatprep.subr.bf16.mxu0 0
        %1228 = vmatpush1.bf16.xpose.msra.mxu0 0
        %1229 = vmatprep.subr.bf16.mxu0 0
        %1230 = vmatpush1.bf16.xpose.msra.mxu0 %v1213
        %1231 = vmatprep.subr.bf16.mxu0 0
        %1232 = vmatpush2.bf16.xpose.msra.mxu0 0
        %1233 = vmatprep.subr.bf16.mxu0 0
        %1234 = vmatpush2.bf16.xpose.msra.mxu0 0
        %1235 = vmatprep.subr.bf16.mxu0 0
        %1236 = vmatpush2.bf16.xpose.msra.mxu0 0
        %1237 = vmatprep.subr.bf16.mxu0 0
        %1238 = vmatpush2.bf16.xpose.msra.mxu0 0
        %1239 = vmatprep.subr.bf16.mxu0 0
        %1240 = vmatpush2.bf16.xpose.msra.mxu0 0
        %1241 = vmatprep.subr.bf16.mxu0 0
        %1242 = vmatpush2.bf16.xpose.msra.mxu0 0
        %1243 = vmatprep.subr.bf16.mxu0 0
        %1244 = vmatpush2.bf16.xpose.msra.mxu0 0
        %1245 = vmatprep.subr.bf16.mxu0 0
        %1246 = vmatpush2.bf16.xpose.msra.mxu0 0
        %1247 = vmatprep.mubr.bf16.mxu0 0
        %1248 = vmatmul.mubr.bf16.gmra.mxu0 %v1210
        %v1249 = vpop.f32.mrf.mxu0
        %v1250 = vadd.f32 %v424, %v1249
        %v1251 = vpop.f32.mrf.mxu0
        %v1252 = vpop.f32.mrf.mxu0
        %v1253 = vadd.f32 %v425, %v1252
        %v1254 = vpop.f32.mrf.mxu0
        %1255 = vdwg.mxu0
        %v1256 = vsel %vm527, %v1199, -inf
        %1257 = vmax.xlane.f32.xlu0 %v1256
        %v1258 = vpop.xlane.xlu0 %1257
        %v1259 = vsel %vm527, %v1202, -inf
        %1260 = vmax.xlane.f32.xlu0 %v1259
        %v1261 = vpop.xlane.xlu0 %1260
        %v1262 = vsel %vm527, %v1250, -inf
        %1263 = vmax.xlane.f32.xlu0 %v1262
        %v1264 = vpop.xlane.xlu0 %1263
        %v1265 = vsel %vm527, %v1253, -inf
        %1266 = vmax.xlane.f32.xlu0 %v1265
        %v1267 = vpop.xlane.xlu0 %1266
        %v1268 = vsub.f32 %v1199, %v1258
        %v1269 = vsub.f32 %v1202, %v1261
        %v1270 = vsub.f32 %v1250, %v1264
        %v1271 = vsub.f32 %v1253, %v1267
        %v1272 = vmul.f32 %v1268, 1.442695
        %v1273 = vpow.pop %v1272
        %v1274 = vmul.f32 %v1269, 1.442695
        %v1275 = vpow.pop %v1274
        %v1276 = vmul.f32 %v1270, 1.442695
        %v1277 = vpow.pop %v1276
        %v1278 = vmul.f32 %v1271, 1.442695
        %v1279 = vpow.pop %v1278
        %v1280 = vsel %vm527, %v1273, 0.0
        %1281 = vadd.xlane.f32.xlu0 %v1280
        %v1282 = vpop.xlane.xlu0 %1281
        %v1283 = vsel %vm527, %v1275, 0.0
        %1284 = vadd.xlane.f32.xlu0 %v1283
        %v1285 = vpop.xlane.xlu0 %1284
        %v1286 = vsel %vm527, %v1277, 0.0
        %1287 = vadd.xlane.f32.xlu0 %v1286
        %v1288 = vpop.xlane.xlu0 %1287
        %v1289 = vsel %vm527, %v1279, 0.0
        %1290 = vadd.xlane.f32.xlu0 %v1289
        %v1291 = vpop.xlane.xlu0 %1290
        %v1292 = vrcp.pop %v1282
        %v1293 = vrcp.pop %v1285
        %v1294 = vrcp.pop %v1288
        %v1295 = vrcp.pop %v1291
        %v1296 = vmul.f32 %v1273, %v1292
        %v1297 = vmul.f32 %v1275, %v1293
        %v1298 = vmul.f32 %v1277, %v1294
        %v1299 = vmul.f32 %v1279, %v1295
        %v1300 = vpack.c.bf16 %v1297, %v1296
        %v1301 = vpack.c.bf16 %v1299, %v1298
        %1302 = vrot.lane.b32.xlu0 %v402, 104
        %v1303 = vpop.permute.xlu0 %1302
        %v1306 = vsel %vm527, %v1300, 0
        %1308 = vmatprep.subr.bf16.mxu0 0
        %1309 = vmatpush1.bf16.msra.mxu0 0
        %1310 = vmatprep.subr.bf16.mxu0 0
        %1311 = vmatpush1.bf16.msra.mxu0 0
        %1312 = vmatprep.subr.bf16.mxu0 0
        %1313 = vmatpush1.bf16.msra.mxu0 0
        %1314 = vmatprep.subr.bf16.mxu0 0
        %1315 = vmatpush1.bf16.msra.mxu0 0
        %1316 = vmatprep.subr.bf16.mxu0 0
        %1317 = vmatpush1.bf16.msra.mxu0 0
        %1318 = vmatprep.subr.bf16.mxu0 0
        %1319 = vmatpush1.bf16.msra.mxu0 0
        %1320 = vmatprep.subr.bf16.mxu0 0
        %1321 = vmatpush1.bf16.msra.mxu0 0
        %1322 = vmatprep.subr.bf16.mxu0 0
        %1323 = vmatpush1.bf16.msra.mxu0 %v1303
        %1324 = vmatprep.subr.bf16.mxu0 0
        %1325 = vmatpush2.bf16.msra.mxu0 0
        %1326 = vmatprep.subr.bf16.mxu0 0
        %1327 = vmatpush2.bf16.msra.mxu0 0
        %1328 = vmatprep.subr.bf16.mxu0 0
        %1329 = vmatpush2.bf16.msra.mxu0 0
        %1330 = vmatprep.subr.bf16.mxu0 0
        %1331 = vmatpush2.bf16.msra.mxu0 0
        %1332 = vmatprep.subr.bf16.mxu0 0
        %1333 = vmatpush2.bf16.msra.mxu0 0
        %1334 = vmatprep.subr.bf16.mxu0 0
        %1335 = vmatpush2.bf16.msra.mxu0 0
        %1336 = vmatprep.subr.bf16.mxu0 0
        %1337 = vmatpush2.bf16.msra.mxu0 0
        %1338 = vmatprep.subr.bf16.mxu0 0
        %1339 = vmatpush2.bf16.msra.mxu0 0
        %1340 = vmatprep.mubr.bf16.mxu0 0
        %1341 = vmatmul.mubr.bf16.gmra.mxu0 %v1306
        %v1342 = vpop.f32.mrf.mxu0
        %v1343 = vadd.f32 0.0, %v1342
        %v1344 = vpop.f32.mrf.mxu0
        %v1345 = vpop.f32.mrf.mxu0
        %v1346 = vadd.f32 0.0, %v1345
        %v1347 = vpop.f32.mrf.mxu0
        %1348 = vdwg.mxu0
        %1349 = vrot.lane.b32.xlu0 %v404, 104
        %v1350 = vpop.permute.xlu0 %1349
        %v1353 = vsel %vm527, %v1301, 0
        %1355 = vmatprep.subr.bf16.mxu0 0
        %1356 = vmatpush1.bf16.msra.mxu0 0
        %1357 = vmatprep.subr.bf16.mxu0 0
        %1358 = vmatpush1.bf16.msra.mxu0 0
        %1359 = vmatprep.subr.bf16.mxu0 0
        %1360 = vmatpush1.bf16.msra.mxu0 0
        %1361 = vmatprep.subr.bf16.mxu0 0
        %1362 = vmatpush1.bf16.msra.mxu0 0
        %1363 = vmatprep.subr.bf16.mxu0 0
        %1364 = vmatpush1.bf16.msra.mxu0 0
        %1365 = vmatprep.subr.bf16.mxu0 0
        %1366 = vmatpush1.bf16.msra.mxu0 0
        %1367 = vmatprep.subr.bf16.mxu0 0
        %1368 = vmatpush1.bf16.msra.mxu0 0
        %1369 = vmatprep.subr.bf16.mxu0 0
        %1370 = vmatpush1.bf16.msra.mxu0 %v1350
        %1371 = vmatprep.subr.bf16.mxu0 0
        %1372 = vmatpush2.bf16.msra.mxu0 0
        %1373 = vmatprep.subr.bf16.mxu0 0
        %1374 = vmatpush2.bf16.msra.mxu0 0
        %1375 = vmatprep.subr.bf16.mxu0 0
        %1376 = vmatpush2.bf16.msra.mxu0 0
        %1377 = vmatprep.subr.bf16.mxu0 0
        %1378 = vmatpush2.bf16.msra.mxu0 0
        %1379 = vmatprep.subr.bf16.mxu0 0
        %1380 = vmatpush2.bf16.msra.mxu0 0
        %1381 = vmatprep.subr.bf16.mxu0 0
        %1382 = vmatpush2.bf16.msra.mxu0 0
        %1383 = vmatprep.subr.bf16.mxu0 0
        %1384 = vmatpush2.bf16.msra.mxu0 0
        %1385 = vmatprep.subr.bf16.mxu0 0
        %1386 = vmatpush2.bf16.msra.mxu0 0
        %1387 = vmatprep.mubr.bf16.mxu0 0
        %1388 = vmatmul.mubr.bf16.gmra.mxu0 %v1353
        %v1389 = vpop.f32.mrf.mxu0
        %v1390 = vadd.f32 0.0, %v1389
        %v1391 = vpop.f32.mrf.mxu0
        %v1392 = vpop.f32.mrf.mxu0
        %v1393 = vadd.f32 0.0, %v1392
        %v1394 = vpop.f32.mrf.mxu0
        %1395 = vdwg.mxu0
        %v1396 = vpack.c.bf16 %v1346, %v1343
        %v1397 = vpack.c.bf16 %v1393, %v1390
        %1398 = vrot.lane.b32.xlu0 %v401, 96
        %v1399 = vpop.permute.xlu0 %1398
        %1400 = vrot.lane.b32.xlu0 %v401, 32
        %v1401 = vpop.permute.xlu0 %1400
        %v1403 = vsel %vm429, %v1399, 0
        %v1406 = vsel %vm429, %v1401, 0
        %1408 = vmatprep.subr.bf16.mxu0 0
        %1409 = vmatpush1.bf16.xpose.msra.mxu0 0
        %1410 = vmatprep.subr.bf16.mxu0 0
        %1411 = vmatpush1.bf16.xpose.msra.mxu0 0
        %1412 = vmatprep.subr.bf16.mxu0 0
        %1413 = vmatpush1.bf16.xpose.msra.mxu0 0
        %1414 = vmatprep.subr.bf16.mxu0 0
        %1415 = vmatpush1.bf16.xpose.msra.mxu0 0
        %1416 = vmatprep.subr.bf16.mxu0 0
        %1417 = vmatpush1.bf16.xpose.msra.mxu0 0
        %1418 = vmatprep.subr.bf16.mxu0 0
        %1419 = vmatpush1.bf16.xpose.msra.mxu0 0
        %1420 = vmatprep.subr.bf16.mxu0 0
        %1421 = vmatpush1.bf16.xpose.msra.mxu0 0
        %1422 = vmatprep.subr.bf16.mxu0 0
        %1423 = vmatpush1.bf16.xpose.msra.mxu0 %v1406
        %1424 = vmatprep.subr.bf16.mxu0 0
        %1425 = vmatpush2.bf16.xpose.msra.mxu0 0
        %1426 = vmatprep.subr.bf16.mxu0 0
        %1427 = vmatpush2.bf16.xpose.msra.mxu0 0
        %1428 = vmatprep.subr.bf16.mxu0 0
        %1429 = vmatpush2.bf16.xpose.msra.mxu0 0
        %1430 = vmatprep.subr.bf16.mxu0 0
        %1431 = vmatpush2.bf16.xpose.msra.mxu0 0
        %1432 = vmatprep.subr.bf16.mxu0 0
        %1433 = vmatpush2.bf16.xpose.msra.mxu0 0
        %1434 = vmatprep.subr.bf16.mxu0 0
        %1435 = vmatpush2.bf16.xpose.msra.mxu0 0
        %1436 = vmatprep.subr.bf16.mxu0 0
        %1437 = vmatpush2.bf16.xpose.msra.mxu0 0
        %1438 = vmatprep.subr.bf16.mxu0 0
        %1439 = vmatpush2.bf16.xpose.msra.mxu0 0
        %1440 = vmatprep.mubr.bf16.mxu0 0
        %1441 = vmatmul.mubr.bf16.gmra.mxu0 %v1403
        %v1442 = vpop.f32.mrf.mxu0
        %v1443 = vadd.f32 %v424, %v1442
        %v1444 = vpop.f32.mrf.mxu0
        %v1445 = vpop.f32.mrf.mxu0
        %v1446 = vadd.f32 %v425, %v1445
        %v1447 = vpop.f32.mrf.mxu0
        %1448 = vdwg.mxu0
        %1449 = vrot.lane.b32.xlu0 %v403, 96
        %v1450 = vpop.permute.xlu0 %1449
        %1451 = vrot.lane.b32.xlu0 %v403, 32
        %v1452 = vpop.permute.xlu0 %1451
        %v1454 = vsel %vm429, %v1450, 0
        %v1457 = vsel %vm429, %v1452, 0
        %1459 = vmatprep.subr.bf16.mxu0 0
        %1460 = vmatpush1.bf16.xpose.msra.mxu0 0
        %1461 = vmatprep.subr.bf16.mxu0 0
        %1462 = vmatpush1.bf16.xpose.msra.mxu0 0
        %1463 = vmatprep.subr.bf16.mxu0 0
        %1464 = vmatpush1.bf16.xpose.msra.mxu0 0
        %1465 = vmatprep.subr.bf16.mxu0 0
        %1466 = vmatpush1.bf16.xpose.msra.mxu0 0
        %1467 = vmatprep.subr.bf16.mxu0 0
        %1468 = vmatpush1.bf16.xpose.msra.mxu0 0
        %1469 = vmatprep.subr.bf16.mxu0 0
        %1470 = vmatpush1.bf16.xpose.msra.mxu0 0
        %1471 = vmatprep.subr.bf16.mxu0 0
        %1472 = vmatpush1.bf16.xpose.msra.mxu0 0
        %1473 = vmatprep.subr.bf16.mxu0 0
        %1474 = vmatpush1.bf16.xpose.msra.mxu0 %v1457
        %1475 = vmatprep.subr.bf16.mxu0 0
        %1476 = vmatpush2.bf16.xpose.msra.mxu0 0
        %1477 = vmatprep.subr.bf16.mxu0 0
        %1478 = vmatpush2.bf16.xpose.msra.mxu0 0
        %1479 = vmatprep.subr.bf16.mxu0 0
        %1480 = vmatpush2.bf16.xpose.msra.mxu0 0
        %1481 = vmatprep.subr.bf16.mxu0 0
        %1482 = vmatpush2.bf16.xpose.msra.mxu0 0
        %1483 = vmatprep.subr.bf16.mxu0 0
        %1484 = vmatpush2.bf16.xpose.msra.mxu0 0
        %1485 = vmatprep.subr.bf16.mxu0 0
        %1486 = vmatpush2.bf16.xpose.msra.mxu0 0
        %1487 = vmatprep.subr.bf16.mxu0 0
        %1488 = vmatpush2.bf16.xpose.msra.mxu0 0
        %1489 = vmatprep.subr.bf16.mxu0 0
        %1490 = vmatpush2.bf16.xpose.msra.mxu0 0
        %1491 = vmatprep.mubr.bf16.mxu0 0
        %1492 = vmatmul.mubr.bf16.gmra.mxu0 %v1454
        %v1493 = vpop.f32.mrf.mxu0
        %v1494 = vadd.f32 %v424, %v1493
        %v1495 = vpop.f32.mrf.mxu0
        %v1496 = vpop.f32.mrf.mxu0
        %v1497 = vadd.f32 %v425, %v1496
        %v1498 = vpop.f32.mrf.mxu0
        %1499 = vdwg.mxu0
        %v1500 = vsel %vm527, %v1443, -inf
        %1501 = vmax.xlane.f32.xlu0 %v1500
        %v1502 = vpop.xlane.xlu0 %1501
        %v1503 = vsel %vm527, %v1446, -inf
        %1504 = vmax.xlane.f32.xlu0 %v1503
        %v1505 = vpop.xlane.xlu0 %1504
        %v1506 = vsel %vm527, %v1494, -inf
        %1507 = vmax.xlane.f32.xlu0 %v1506
        %v1508 = vpop.xlane.xlu0 %1507
        %v1509 = vsel %vm527, %v1497, -inf
        %1510 = vmax.xlane.f32.xlu0 %v1509
        %v1511 = vpop.xlane.xlu0 %1510
        %v1512 = vsub.f32 %v1443, %v1502
        %v1513 = vsub.f32 %v1446, %v1505
        %v1514 = vsub.f32 %v1494, %v1508
        %v1515 = vsub.f32 %v1497, %v1511
        %v1516 = vmul.f32 %v1512, 1.442695
        %v1517 = vpow.pop %v1516
        %v1518 = vmul.f32 %v1513, 1.442695
        %v1519 = vpow.pop %v1518
        %v1520 = vmul.f32 %v1514, 1.442695
        %v1521 = vpow.pop %v1520
        %v1522 = vmul.f32 %v1515, 1.442695
        %v1523 = vpow.pop %v1522
        %v1524 = vsel %vm527, %v1517, 0.0
        %1525 = vadd.xlane.f32.xlu0 %v1524
        %v1526 = vpop.xlane.xlu0 %1525
        %v1527 = vsel %vm527, %v1519, 0.0
        %1528 = vadd.xlane.f32.xlu0 %v1527
        %v1529 = vpop.xlane.xlu0 %1528
        %v1530 = vsel %vm527, %v1521, 0.0
        %1531 = vadd.xlane.f32.xlu0 %v1530
        %v1532 = vpop.xlane.xlu0 %1531
        %v1533 = vsel %vm527, %v1523, 0.0
        %1534 = vadd.xlane.f32.xlu0 %v1533
        %v1535 = vpop.xlane.xlu0 %1534
        %v1536 = vrcp.pop %v1526
        %v1537 = vrcp.pop %v1529
        %v1538 = vrcp.pop %v1532
        %v1539 = vrcp.pop %v1535
        %v1540 = vmul.f32 %v1517, %v1536
        %v1541 = vmul.f32 %v1519, %v1537
        %v1542 = vmul.f32 %v1521, %v1538
        %v1543 = vmul.f32 %v1523, %v1539
        %v1544 = vpack.c.bf16 %v1541, %v1540
        %v1545 = vpack.c.bf16 %v1543, %v1542
        %1546 = vrot.lane.b32.xlu0 %v402, 96
        %v1547 = vpop.permute.xlu0 %1546
        %v1550 = vsel %vm527, %v1544, 0
        %1552 = vmatprep.subr.bf16.mxu0 0
        %1553 = vmatpush1.bf16.msra.mxu0 0
        %1554 = vmatprep.subr.bf16.mxu0 0
        %1555 = vmatpush1.bf16.msra.mxu0 0
        %1556 = vmatprep.subr.bf16.mxu0 0
        %1557 = vmatpush1.bf16.msra.mxu0 0
        %1558 = vmatprep.subr.bf16.mxu0 0
        %1559 = vmatpush1.bf16.msra.mxu0 0
        %1560 = vmatprep.subr.bf16.mxu0 0
        %1561 = vmatpush1.bf16.msra.mxu0 0
        %1562 = vmatprep.subr.bf16.mxu0 0
        %1563 = vmatpush1.bf16.msra.mxu0 0
        %1564 = vmatprep.subr.bf16.mxu0 0
        %1565 = vmatpush1.bf16.msra.mxu0 0
        %1566 = vmatprep.subr.bf16.mxu0 0
        %1567 = vmatpush1.bf16.msra.mxu0 %v1547
        %1568 = vmatprep.subr.bf16.mxu0 0
        %1569 = vmatpush2.bf16.msra.mxu0 0
        %1570 = vmatprep.subr.bf16.mxu0 0
        %1571 = vmatpush2.bf16.msra.mxu0 0
        %1572 = vmatprep.subr.bf16.mxu0 0
        %1573 = vmatpush2.bf16.msra.mxu0 0
        %1574 = vmatprep.subr.bf16.mxu0 0
        %1575 = vmatpush2.bf16.msra.mxu0 0
        %1576 = vmatprep.subr.bf16.mxu0 0
        %1577 = vmatpush2.bf16.msra.mxu0 0
        %1578 = vmatprep.subr.bf16.mxu0 0
        %1579 = vmatpush2.bf16.msra.mxu0 0
        %1580 = vmatprep.subr.bf16.mxu0 0
        %1581 = vmatpush2.bf16.msra.mxu0 0
        %1582 = vmatprep.subr.bf16.mxu0 0
        %1583 = vmatpush2.bf16.msra.mxu0 0
        %1584 = vmatprep.mubr.bf16.mxu0 0
        %1585 = vmatmul.mubr.bf16.gmra.mxu0 %v1550
        %v1586 = vpop.f32.mrf.mxu0
        %v1587 = vadd.f32 0.0, %v1586
        %v1588 = vpop.f32.mrf.mxu0
        %v1589 = vpop.f32.mrf.mxu0
        %v1590 = vadd.f32 0.0, %v1589
        %v1591 = vpop.f32.mrf.mxu0
        %1592 = vdwg.mxu0
        %1593 = vrot.lane.b32.xlu0 %v404, 96
        %v1594 = vpop.permute.xlu0 %1593
        %v1597 = vsel %vm527, %v1545, 0
        %1599 = vmatprep.subr.bf16.mxu0 0
        %1600 = vmatpush1.bf16.msra.mxu0 0
        %1601 = vmatprep.subr.bf16.mxu0 0
        %1602 = vmatpush1.bf16.msra.mxu0 0
        %1603 = vmatprep.subr.bf16.mxu0 0
        %1604 = vmatpush1.bf16.msra.mxu0 0
        %1605 = vmatprep.subr.bf16.mxu0 0
        %1606 = vmatpush1.bf16.msra.mxu0 0
        %1607 = vmatprep.subr.bf16.mxu0 0
        %1608 = vmatpush1.bf16.msra.mxu0 0
        %1609 = vmatprep.subr.bf16.mxu0 0
        %1610 = vmatpush1.bf16.msra.mxu0 0
        %1611 = vmatprep.subr.bf16.mxu0 0
        %1612 = vmatpush1.bf16.msra.mxu0 0
        %1613 = vmatprep.subr.bf16.mxu0 0
        %1614 = vmatpush1.bf16.msra.mxu0 %v1594
        %1615 = vmatprep.subr.bf16.mxu0 0
        %1616 = vmatpush2.bf16.msra.mxu0 0
        %1617 = vmatprep.subr.bf16.mxu0 0
        %1618 = vmatpush2.bf16.msra.mxu0 0
        %1619 = vmatprep.subr.bf16.mxu0 0
        %1620 = vmatpush2.bf16.msra.mxu0 0
        %1621 = vmatprep.subr.bf16.mxu0 0
        %1622 = vmatpush2.bf16.msra.mxu0 0
        %1623 = vmatprep.subr.bf16.mxu0 0
        %1624 = vmatpush2.bf16.msra.mxu0 0
        %1625 = vmatprep.subr.bf16.mxu0 0
        %1626 = vmatpush2.bf16.msra.mxu0 0
        %1627 = vmatprep.subr.bf16.mxu0 0
        %1628 = vmatpush2.bf16.msra.mxu0 0
        %1629 = vmatprep.subr.bf16.mxu0 0
        %1630 = vmatpush2.bf16.msra.mxu0 0
        %1631 = vmatprep.mubr.bf16.mxu0 0
        %1632 = vmatmul.mubr.bf16.gmra.mxu0 %v1597
        %v1633 = vpop.f32.mrf.mxu0
        %v1634 = vadd.f32 0.0, %v1633
        %v1635 = vpop.f32.mrf.mxu0
        %v1636 = vpop.f32.mrf.mxu0
        %v1637 = vadd.f32 0.0, %v1636
        %v1638 = vpop.f32.mrf.mxu0
        %1639 = vdwg.mxu0
        %v1640 = vpack.c.bf16 %v1590, %v1587
        %v1641 = vpack.c.bf16 %v1637, %v1634
        %1642 = vrot.lane.b32.xlu0 %v401, 88
        %v1643 = vpop.permute.xlu0 %1642
        %1644 = vrot.lane.b32.xlu0 %v401, 24
        %v1645 = vpop.permute.xlu0 %1644
        %v1647 = vsel %vm429, %v1643, 0
        %v1650 = vsel %vm429, %v1645, 0
        %1652 = vmatprep.subr.bf16.mxu0 0
        %1653 = vmatpush1.bf16.xpose.msra.mxu0 0
        %1654 = vmatprep.subr.bf16.mxu0 0
        %1655 = vmatpush1.bf16.xpose.msra.mxu0 0
        %1656 = vmatprep.subr.bf16.mxu0 0
        %1657 = vmatpush1.bf16.xpose.msra.mxu0 0
        %1658 = vmatprep.subr.bf16.mxu0 0
        %1659 = vmatpush1.bf16.xpose.msra.mxu0 0
        %1660 = vmatprep.subr.bf16.mxu0 0
        %1661 = vmatpush1.bf16.xpose.msra.mxu0 0
        %1662 = vmatprep.subr.bf16.mxu0 0
        %1663 = vmatpush1.bf16.xpose.msra.mxu0 0
        %1664 = vmatprep.subr.bf16.mxu0 0
        %1665 = vmatpush1.bf16.xpose.msra.mxu0 0
        %1666 = vmatprep.subr.bf16.mxu0 0
        %1667 = vmatpush1.bf16.xpose.msra.mxu0 %v1650
        %1668 = vmatprep.subr.bf16.mxu0 0
        %1669 = vmatpush2.bf16.xpose.msra.mxu0 0
        %1670 = vmatprep.subr.bf16.mxu0 0
        %1671 = vmatpush2.bf16.xpose.msra.mxu0 0
        %1672 = vmatprep.subr.bf16.mxu0 0
        %1673 = vmatpush2.bf16.xpose.msra.mxu0 0
        %1674 = vmatprep.subr.bf16.mxu0 0
        %1675 = vmatpush2.bf16.xpose.msra.mxu0 0
        %1676 = vmatprep.subr.bf16.mxu0 0
        %1677 = vmatpush2.bf16.xpose.msra.mxu0 0
        %1678 = vmatprep.subr.bf16.mxu0 0
        %1679 = vmatpush2.bf16.xpose.msra.mxu0 0
        %1680 = vmatprep.subr.bf16.mxu0 0
        %1681 = vmatpush2.bf16.xpose.msra.mxu0 0
        %1682 = vmatprep.subr.bf16.mxu0 0
        %1683 = vmatpush2.bf16.xpose.msra.mxu0 0
        %1684 = vmatprep.mubr.bf16.mxu0 0
        %1685 = vmatmul.mubr.bf16.gmra.mxu0 %v1647
        %v1686 = vpop.f32.mrf.mxu0
        %v1687 = vadd.f32 %v424, %v1686
        %v1688 = vpop.f32.mrf.mxu0
        %v1689 = vpop.f32.mrf.mxu0
        %v1690 = vadd.f32 %v425, %v1689
        %v1691 = vpop.f32.mrf.mxu0
        %1692 = vdwg.mxu0
        %1693 = vrot.lane.b32.xlu0 %v403, 88
        %v1694 = vpop.permute.xlu0 %1693
        %1695 = vrot.lane.b32.xlu0 %v403, 24
        %v1696 = vpop.permute.xlu0 %1695
        %v1698 = vsel %vm429, %v1694, 0
        %v1701 = vsel %vm429, %v1696, 0
        %1703 = vmatprep.subr.bf16.mxu0 0
        %1704 = vmatpush1.bf16.xpose.msra.mxu0 0
        %1705 = vmatprep.subr.bf16.mxu0 0
        %1706 = vmatpush1.bf16.xpose.msra.mxu0 0
        %1707 = vmatprep.subr.bf16.mxu0 0
        %1708 = vmatpush1.bf16.xpose.msra.mxu0 0
        %1709 = vmatprep.subr.bf16.mxu0 0
        %1710 = vmatpush1.bf16.xpose.msra.mxu0 0
        %1711 = vmatprep.subr.bf16.mxu0 0
        %1712 = vmatpush1.bf16.xpose.msra.mxu0 0
        %1713 = vmatprep.subr.bf16.mxu0 0
        %1714 = vmatpush1.bf16.xpose.msra.mxu0 0
        %1715 = vmatprep.subr.bf16.mxu0 0
        %1716 = vmatpush1.bf16.xpose.msra.mxu0 0
        %1717 = vmatprep.subr.bf16.mxu0 0
        %1718 = vmatpush1.bf16.xpose.msra.mxu0 %v1701
        %1719 = vmatprep.subr.bf16.mxu0 0
        %1720 = vmatpush2.bf16.xpose.msra.mxu0 0
        %1721 = vmatprep.subr.bf16.mxu0 0
        %1722 = vmatpush2.bf16.xpose.msra.mxu0 0
        %1723 = vmatprep.subr.bf16.mxu0 0
        %1724 = vmatpush2.bf16.xpose.msra.mxu0 0
        %1725 = vmatprep.subr.bf16.mxu0 0
        %1726 = vmatpush2.bf16.xpose.msra.mxu0 0
        %1727 = vmatprep.subr.bf16.mxu0 0
        %1728 = vmatpush2.bf16.xpose.msra.mxu0 0
        %1729 = vmatprep.subr.bf16.mxu0 0
        %1730 = vmatpush2.bf16.xpose.msra.mxu0 0
        %1731 = vmatprep.subr.bf16.mxu0 0
        %1732 = vmatpush2.bf16.xpose.msra.mxu0 0
        %1733 = vmatprep.subr.bf16.mxu0 0
        %1734 = vmatpush2.bf16.xpose.msra.mxu0 0
        %1735 = vmatprep.mubr.bf16.mxu0 0
        %1736 = vmatmul.mubr.bf16.gmra.mxu0 %v1698
        %v1737 = vpop.f32.mrf.mxu0
        %v1738 = vadd.f32 %v424, %v1737
        %v1739 = vpop.f32.mrf.mxu0
        %v1740 = vpop.f32.mrf.mxu0
        %v1741 = vadd.f32 %v425, %v1740
        %v1742 = vpop.f32.mrf.mxu0
        %1743 = vdwg.mxu0
        %v1744 = vsel %vm527, %v1687, -inf
        %1745 = vmax.xlane.f32.xlu0 %v1744
        %v1746 = vpop.xlane.xlu0 %1745
        %v1747 = vsel %vm527, %v1690, -inf
        %1748 = vmax.xlane.f32.xlu0 %v1747
        %v1749 = vpop.xlane.xlu0 %1748
        %v1750 = vsel %vm527, %v1738, -inf
        %1751 = vmax.xlane.f32.xlu0 %v1750
        %v1752 = vpop.xlane.xlu0 %1751
        %v1753 = vsel %vm527, %v1741, -inf
        %1754 = vmax.xlane.f32.xlu0 %v1753
        %v1755 = vpop.xlane.xlu0 %1754
        %v1756 = vsub.f32 %v1687, %v1746
        %v1757 = vsub.f32 %v1690, %v1749
        %v1758 = vsub.f32 %v1738, %v1752
        %v1759 = vsub.f32 %v1741, %v1755
        %v1760 = vmul.f32 %v1756, 1.442695
        %v1761 = vpow.pop %v1760
        %v1762 = vmul.f32 %v1757, 1.442695
        %v1763 = vpow.pop %v1762
        %v1764 = vmul.f32 %v1758, 1.442695
        %v1765 = vpow.pop %v1764
        %v1766 = vmul.f32 %v1759, 1.442695
        %v1767 = vpow.pop %v1766
        %v1768 = vsel %vm527, %v1761, 0.0
        %1769 = vadd.xlane.f32.xlu0 %v1768
        %v1770 = vpop.xlane.xlu0 %1769
        %v1771 = vsel %vm527, %v1763, 0.0
        %1772 = vadd.xlane.f32.xlu0 %v1771
        %v1773 = vpop.xlane.xlu0 %1772
        %v1774 = vsel %vm527, %v1765, 0.0
        %1775 = vadd.xlane.f32.xlu0 %v1774
        %v1776 = vpop.xlane.xlu0 %1775
        %v1777 = vsel %vm527, %v1767, 0.0
        %1778 = vadd.xlane.f32.xlu0 %v1777
        %v1779 = vpop.xlane.xlu0 %1778
        %v1780 = vrcp.pop %v1770
        %v1781 = vrcp.pop %v1773
        %v1782 = vrcp.pop %v1776
        %v1783 = vrcp.pop %v1779
        %v1784 = vmul.f32 %v1761, %v1780
        %v1785 = vmul.f32 %v1763, %v1781
        %v1786 = vmul.f32 %v1765, %v1782
        %v1787 = vmul.f32 %v1767, %v1783
        %v1788 = vpack.c.bf16 %v1785, %v1784
        %v1789 = vpack.c.bf16 %v1787, %v1786
        %1790 = vrot.lane.b32.xlu0 %v402, 88
        %v1791 = vpop.permute.xlu0 %1790
        %v1794 = vsel %vm527, %v1788, 0
        %1796 = vmatprep.subr.bf16.mxu0 0
        %1797 = vmatpush1.bf16.msra.mxu0 0
        %1798 = vmatprep.subr.bf16.mxu0 0
        %1799 = vmatpush1.bf16.msra.mxu0 0
        %1800 = vmatprep.subr.bf16.mxu0 0
        %1801 = vmatpush1.bf16.msra.mxu0 0
        %1802 = vmatprep.subr.bf16.mxu0 0
        %1803 = vmatpush1.bf16.msra.mxu0 0
        %1804 = vmatprep.subr.bf16.mxu0 0
        %1805 = vmatpush1.bf16.msra.mxu0 0
        %1806 = vmatprep.subr.bf16.mxu0 0
        %1807 = vmatpush1.bf16.msra.mxu0 0
        %1808 = vmatprep.subr.bf16.mxu0 0
        %1809 = vmatpush1.bf16.msra.mxu0 0
        %1810 = vmatprep.subr.bf16.mxu0 0
        %1811 = vmatpush1.bf16.msra.mxu0 %v1791
        %1812 = vmatprep.subr.bf16.mxu0 0
        %1813 = vmatpush2.bf16.msra.mxu0 0
        %1814 = vmatprep.subr.bf16.mxu0 0
        %1815 = vmatpush2.bf16.msra.mxu0 0
        %1816 = vmatprep.subr.bf16.mxu0 0
        %1817 = vmatpush2.bf16.msra.mxu0 0
        %1818 = vmatprep.subr.bf16.mxu0 0
        %1819 = vmatpush2.bf16.msra.mxu0 0
        %1820 = vmatprep.subr.bf16.mxu0 0
        %1821 = vmatpush2.bf16.msra.mxu0 0
        %1822 = vmatprep.subr.bf16.mxu0 0
        %1823 = vmatpush2.bf16.msra.mxu0 0
        %1824 = vmatprep.subr.bf16.mxu0 0
        %1825 = vmatpush2.bf16.msra.mxu0 0
        %1826 = vmatprep.subr.bf16.mxu0 0
        %1827 = vmatpush2.bf16.msra.mxu0 0
        %1828 = vmatprep.mubr.bf16.mxu0 0
        %1829 = vmatmul.mubr.bf16.gmra.mxu0 %v1794
        %v1830 = vpop.f32.mrf.mxu0
        %v1831 = vadd.f32 0.0, %v1830
        %v1832 = vpop.f32.mrf.mxu0
        %v1833 = vpop.f32.mrf.mxu0
        %v1834 = vadd.f32 0.0, %v1833
        %v1835 = vpop.f32.mrf.mxu0
        %1836 = vdwg.mxu0
        %1837 = vrot.lane.b32.xlu0 %v404, 88
        %v1838 = vpop.permute.xlu0 %1837
        %v1841 = vsel %vm527, %v1789, 0
        %1843 = vmatprep.subr.bf16.mxu0 0
        %1844 = vmatpush1.bf16.msra.mxu0 0
        %1845 = vmatprep.subr.bf16.mxu0 0
        %1846 = vmatpush1.bf16.msra.mxu0 0
        %1847 = vmatprep.subr.bf16.mxu0 0
        %1848 = vmatpush1.bf16.msra.mxu0 0
        %1849 = vmatprep.subr.bf16.mxu0 0
        %1850 = vmatpush1.bf16.msra.mxu0 0
        %1851 = vmatprep.subr.bf16.mxu0 0
        %1852 = vmatpush1.bf16.msra.mxu0 0
        %1853 = vmatprep.subr.bf16.mxu0 0
        %1854 = vmatpush1.bf16.msra.mxu0 0
        %1855 = vmatprep.subr.bf16.mxu0 0
        %1856 = vmatpush1.bf16.msra.mxu0 0
        %1857 = vmatprep.subr.bf16.mxu0 0
        %1858 = vmatpush1.bf16.msra.mxu0 %v1838
        %1859 = vmatprep.subr.bf16.mxu0 0
        %1860 = vmatpush2.bf16.msra.mxu0 0
        %1861 = vmatprep.subr.bf16.mxu0 0
        %1862 = vmatpush2.bf16.msra.mxu0 0
        %1863 = vmatprep.subr.bf16.mxu0 0
        %1864 = vmatpush2.bf16.msra.mxu0 0
        %1865 = vmatprep.subr.bf16.mxu0 0
        %1866 = vmatpush2.bf16.msra.mxu0 0
        %1867 = vmatprep.subr.bf16.mxu0 0
        %1868 = vmatpush2.bf16.msra.mxu0 0
        %1869 = vmatprep.subr.bf16.mxu0 0
        %1870 = vmatpush2.bf16.msra.mxu0 0
        %1871 = vmatprep.subr.bf16.mxu0 0
        %1872 = vmatpush2.bf16.msra.mxu0 0
        %1873 = vmatprep.subr.bf16.mxu0 0
        %1874 = vmatpush2.bf16.msra.mxu0 0
        %1875 = vmatprep.mubr.bf16.mxu0 0
        %1876 = vmatmul.mubr.bf16.gmra.mxu0 %v1841
        %v1877 = vpop.f32.mrf.mxu0
        %v1878 = vadd.f32 0.0, %v1877
        %v1879 = vpop.f32.mrf.mxu0
        %v1880 = vpop.f32.mrf.mxu0
        %v1881 = vadd.f32 0.0, %v1880
        %v1882 = vpop.f32.mrf.mxu0
        %1883 = vdwg.mxu0
        %v1884 = vpack.c.bf16 %v1834, %v1831
        %v1885 = vpack.c.bf16 %v1881, %v1878
        %1886 = vrot.lane.b32.xlu0 %v401, 80
        %v1887 = vpop.permute.xlu0 %1886
        %1888 = vrot.lane.b32.xlu0 %v401, 16
        %v1889 = vpop.permute.xlu0 %1888
        %v1891 = vsel %vm429, %v1887, 0
        %v1894 = vsel %vm429, %v1889, 0
        %1896 = vmatprep.subr.bf16.mxu0 0
        %1897 = vmatpush1.bf16.xpose.msra.mxu0 0
        %1898 = vmatprep.subr.bf16.mxu0 0
        %1899 = vmatpush1.bf16.xpose.msra.mxu0 0
        %1900 = vmatprep.subr.bf16.mxu0 0
        %1901 = vmatpush1.bf16.xpose.msra.mxu0 0
        %1902 = vmatprep.subr.bf16.mxu0 0
        %1903 = vmatpush1.bf16.xpose.msra.mxu0 0
        %1904 = vmatprep.subr.bf16.mxu0 0
        %1905 = vmatpush1.bf16.xpose.msra.mxu0 0
        %1906 = vmatprep.subr.bf16.mxu0 0
        %1907 = vmatpush1.bf16.xpose.msra.mxu0 0
        %1908 = vmatprep.subr.bf16.mxu0 0
        %1909 = vmatpush1.bf16.xpose.msra.mxu0 0
        %1910 = vmatprep.subr.bf16.mxu0 0
        %1911 = vmatpush1.bf16.xpose.msra.mxu0 %v1894
        %1912 = vmatprep.subr.bf16.mxu0 0
        %1913 = vmatpush2.bf16.xpose.msra.mxu0 0
        %1914 = vmatprep.subr.bf16.mxu0 0
        %1915 = vmatpush2.bf16.xpose.msra.mxu0 0
        %1916 = vmatprep.subr.bf16.mxu0 0
        %1917 = vmatpush2.bf16.xpose.msra.mxu0 0
        %1918 = vmatprep.subr.bf16.mxu0 0
        %1919 = vmatpush2.bf16.xpose.msra.mxu0 0
        %1920 = vmatprep.subr.bf16.mxu0 0
        %1921 = vmatpush2.bf16.xpose.msra.mxu0 0
        %1922 = vmatprep.subr.bf16.mxu0 0
        %1923 = vmatpush2.bf16.xpose.msra.mxu0 0
        %1924 = vmatprep.subr.bf16.mxu0 0
        %1925 = vmatpush2.bf16.xpose.msra.mxu0 0
        %1926 = vmatprep.subr.bf16.mxu0 0
        %1927 = vmatpush2.bf16.xpose.msra.mxu0 0
        %1928 = vmatprep.mubr.bf16.mxu0 0
        %1929 = vmatmul.mubr.bf16.gmra.mxu0 %v1891
        %v1930 = vpop.f32.mrf.mxu0
        %v1931 = vadd.f32 %v424, %v1930
        %v1932 = vpop.f32.mrf.mxu0
        %v1933 = vpop.f32.mrf.mxu0
        %v1934 = vadd.f32 %v425, %v1933
        %v1935 = vpop.f32.mrf.mxu0
        %1936 = vdwg.mxu0
        %1937 = vrot.lane.b32.xlu0 %v403, 80
        %v1938 = vpop.permute.xlu0 %1937
        %1939 = vrot.lane.b32.xlu0 %v403, 16
        %v1940 = vpop.permute.xlu0 %1939
        %v1942 = vsel %vm429, %v1938, 0
        %v1945 = vsel %vm429, %v1940, 0
        %1947 = vmatprep.subr.bf16.mxu0 0
        %1948 = vmatpush1.bf16.xpose.msra.mxu0 0
        %1949 = vmatprep.subr.bf16.mxu0 0
        %1950 = vmatpush1.bf16.xpose.msra.mxu0 0
        %1951 = vmatprep.subr.bf16.mxu0 0
        %1952 = vmatpush1.bf16.xpose.msra.mxu0 0
        %1953 = vmatprep.subr.bf16.mxu0 0
        %1954 = vmatpush1.bf16.xpose.msra.mxu0 0
        %1955 = vmatprep.subr.bf16.mxu0 0
        %1956 = vmatpush1.bf16.xpose.msra.mxu0 0
        %1957 = vmatprep.subr.bf16.mxu0 0
        %1958 = vmatpush1.bf16.xpose.msra.mxu0 0
        %1959 = vmatprep.subr.bf16.mxu0 0
        %1960 = vmatpush1.bf16.xpose.msra.mxu0 0
        %1961 = vmatprep.subr.bf16.mxu0 0
        %1962 = vmatpush1.bf16.xpose.msra.mxu0 %v1945
        %1963 = vmatprep.subr.bf16.mxu0 0
        %1964 = vmatpush2.bf16.xpose.msra.mxu0 0
        %1965 = vmatprep.subr.bf16.mxu0 0
        %1966 = vmatpush2.bf16.xpose.msra.mxu0 0
        %1967 = vmatprep.subr.bf16.mxu0 0
        %1968 = vmatpush2.bf16.xpose.msra.mxu0 0
        %1969 = vmatprep.subr.bf16.mxu0 0
        %1970 = vmatpush2.bf16.xpose.msra.mxu0 0
        %1971 = vmatprep.subr.bf16.mxu0 0
        %1972 = vmatpush2.bf16.xpose.msra.mxu0 0
        %1973 = vmatprep.subr.bf16.mxu0 0
        %1974 = vmatpush2.bf16.xpose.msra.mxu0 0
        %1975 = vmatprep.subr.bf16.mxu0 0
        %1976 = vmatpush2.bf16.xpose.msra.mxu0 0
        %1977 = vmatprep.subr.bf16.mxu0 0
        %1978 = vmatpush2.bf16.xpose.msra.mxu0 0
        %1979 = vmatprep.mubr.bf16.mxu0 0
        %1980 = vmatmul.mubr.bf16.gmra.mxu0 %v1942
        %v1981 = vpop.f32.mrf.mxu0
        %v1982 = vadd.f32 %v424, %v1981
        %v1983 = vpop.f32.mrf.mxu0
        %v1984 = vpop.f32.mrf.mxu0
        %v1985 = vadd.f32 %v425, %v1984
        %v1986 = vpop.f32.mrf.mxu0
        %1987 = vdwg.mxu0
        %v1988 = vsel %vm527, %v1931, -inf
        %1989 = vmax.xlane.f32.xlu0 %v1988
        %v1990 = vpop.xlane.xlu0 %1989
        %v1991 = vsel %vm527, %v1934, -inf
        %1992 = vmax.xlane.f32.xlu0 %v1991
        %v1993 = vpop.xlane.xlu0 %1992
        %v1994 = vsel %vm527, %v1982, -inf
        %1995 = vmax.xlane.f32.xlu0 %v1994
        %v1996 = vpop.xlane.xlu0 %1995
        %v1997 = vsel %vm527, %v1985, -inf
        %1998 = vmax.xlane.f32.xlu0 %v1997
        %v1999 = vpop.xlane.xlu0 %1998
        %v2000 = vsub.f32 %v1931, %v1990
        %v2001 = vsub.f32 %v1934, %v1993
        %v2002 = vsub.f32 %v1982, %v1996
        %v2003 = vsub.f32 %v1985, %v1999
        %v2004 = vmul.f32 %v2000, 1.442695
        %v2005 = vpow.pop %v2004
        %v2006 = vmul.f32 %v2001, 1.442695
        %v2007 = vpow.pop %v2006
        %v2008 = vmul.f32 %v2002, 1.442695
        %v2009 = vpow.pop %v2008
        %v2010 = vmul.f32 %v2003, 1.442695
        %v2011 = vpow.pop %v2010
        %v2012 = vsel %vm527, %v2005, 0.0
        %2013 = vadd.xlane.f32.xlu0 %v2012
        %v2014 = vpop.xlane.xlu0 %2013
        %v2015 = vsel %vm527, %v2007, 0.0
        %2016 = vadd.xlane.f32.xlu0 %v2015
        %v2017 = vpop.xlane.xlu0 %2016
        %v2018 = vsel %vm527, %v2009, 0.0
        %2019 = vadd.xlane.f32.xlu0 %v2018
        %v2020 = vpop.xlane.xlu0 %2019
        %v2021 = vsel %vm527, %v2011, 0.0
        %2022 = vadd.xlane.f32.xlu0 %v2021
        %v2023 = vpop.xlane.xlu0 %2022
        %v2024 = vrcp.pop %v2014
        %v2025 = vrcp.pop %v2017
        %v2026 = vrcp.pop %v2020
        %v2027 = vrcp.pop %v2023
        %v2028 = vmul.f32 %v2005, %v2024
        %v2029 = vmul.f32 %v2007, %v2025
        %v2030 = vmul.f32 %v2009, %v2026
        %v2031 = vmul.f32 %v2011, %v2027
        %v2032 = vpack.c.bf16 %v2029, %v2028
        %v2033 = vpack.c.bf16 %v2031, %v2030
        %2034 = vrot.lane.b32.xlu0 %v402, 80
        %v2035 = vpop.permute.xlu0 %2034
        %v2038 = vsel %vm527, %v2032, 0
        %2040 = vmatprep.subr.bf16.mxu0 0
        %2041 = vmatpush1.bf16.msra.mxu0 0
        %2042 = vmatprep.subr.bf16.mxu0 0
        %2043 = vmatpush1.bf16.msra.mxu0 0
        %2044 = vmatprep.subr.bf16.mxu0 0
        %2045 = vmatpush1.bf16.msra.mxu0 0
        %2046 = vmatprep.subr.bf16.mxu0 0
        %2047 = vmatpush1.bf16.msra.mxu0 0
        %2048 = vmatprep.subr.bf16.mxu0 0
        %2049 = vmatpush1.bf16.msra.mxu0 0
        %2050 = vmatprep.subr.bf16.mxu0 0
        %2051 = vmatpush1.bf16.msra.mxu0 0
        %2052 = vmatprep.subr.bf16.mxu0 0
        %2053 = vmatpush1.bf16.msra.mxu0 0
        %2054 = vmatprep.subr.bf16.mxu0 0
        %2055 = vmatpush1.bf16.msra.mxu0 %v2035
        %2056 = vmatprep.subr.bf16.mxu0 0
        %2057 = vmatpush2.bf16.msra.mxu0 0
        %2058 = vmatprep.subr.bf16.mxu0 0
        %2059 = vmatpush2.bf16.msra.mxu0 0
        %2060 = vmatprep.subr.bf16.mxu0 0
        %2061 = vmatpush2.bf16.msra.mxu0 0
        %2062 = vmatprep.subr.bf16.mxu0 0
        %2063 = vmatpush2.bf16.msra.mxu0 0
        %2064 = vmatprep.subr.bf16.mxu0 0
        %2065 = vmatpush2.bf16.msra.mxu0 0
        %2066 = vmatprep.subr.bf16.mxu0 0
        %2067 = vmatpush2.bf16.msra.mxu0 0
        %2068 = vmatprep.subr.bf16.mxu0 0
        %2069 = vmatpush2.bf16.msra.mxu0 0
        %2070 = vmatprep.subr.bf16.mxu0 0
        %2071 = vmatpush2.bf16.msra.mxu0 0
        %2072 = vmatprep.mubr.bf16.mxu0 0
        %2073 = vmatmul.mubr.bf16.gmra.mxu0 %v2038
        %v2074 = vpop.f32.mrf.mxu0
        %v2075 = vadd.f32 0.0, %v2074
        %v2076 = vpop.f32.mrf.mxu0
        %v2077 = vpop.f32.mrf.mxu0
        %v2078 = vadd.f32 0.0, %v2077
        %v2079 = vpop.f32.mrf.mxu0
        %2080 = vdwg.mxu0
        %2081 = vrot.lane.b32.xlu0 %v404, 80
        %v2082 = vpop.permute.xlu0 %2081
        %v2085 = vsel %vm527, %v2033, 0
        %2087 = vmatprep.subr.bf16.mxu0 0
        %2088 = vmatpush1.bf16.msra.mxu0 0
        %2089 = vmatprep.subr.bf16.mxu0 0
        %2090 = vmatpush1.bf16.msra.mxu0 0
        %2091 = vmatprep.subr.bf16.mxu0 0
        %2092 = vmatpush1.bf16.msra.mxu0 0
        %2093 = vmatprep.subr.bf16.mxu0 0
        %2094 = vmatpush1.bf16.msra.mxu0 0
        %2095 = vmatprep.subr.bf16.mxu0 0
        %2096 = vmatpush1.bf16.msra.mxu0 0
        %2097 = vmatprep.subr.bf16.mxu0 0
        %2098 = vmatpush1.bf16.msra.mxu0 0
        %2099 = vmatprep.subr.bf16.mxu0 0
        %2100 = vmatpush1.bf16.msra.mxu0 0
        %2101 = vmatprep.subr.bf16.mxu0 0
        %2102 = vmatpush1.bf16.msra.mxu0 %v2082
        %2103 = vmatprep.subr.bf16.mxu0 0
        %2104 = vmatpush2.bf16.msra.mxu0 0
        %2105 = vmatprep.subr.bf16.mxu0 0
        %2106 = vmatpush2.bf16.msra.mxu0 0
        %2107 = vmatprep.subr.bf16.mxu0 0
        %2108 = vmatpush2.bf16.msra.mxu0 0
        %2109 = vmatprep.subr.bf16.mxu0 0
        %2110 = vmatpush2.bf16.msra.mxu0 0
        %2111 = vmatprep.subr.bf16.mxu0 0
        %2112 = vmatpush2.bf16.msra.mxu0 0
        %2113 = vmatprep.subr.bf16.mxu0 0
        %2114 = vmatpush2.bf16.msra.mxu0 0
        %2115 = vmatprep.subr.bf16.mxu0 0
        %2116 = vmatpush2.bf16.msra.mxu0 0
        %2117 = vmatprep.subr.bf16.mxu0 0
        %2118 = vmatpush2.bf16.msra.mxu0 0
        %2119 = vmatprep.mubr.bf16.mxu0 0
        %2120 = vmatmul.mubr.bf16.gmra.mxu0 %v2085
        %v2121 = vpop.f32.mrf.mxu0
        %v2122 = vadd.f32 0.0, %v2121
        %v2123 = vpop.f32.mrf.mxu0
        %v2124 = vpop.f32.mrf.mxu0
        %v2125 = vadd.f32 0.0, %v2124
        %v2126 = vpop.f32.mrf.mxu0
        %2127 = vdwg.mxu0
        %v2128 = vpack.c.bf16 %v2078, %v2075
        %v2129 = vpack.c.bf16 %v2125, %v2122
        %2130 = vrot.lane.b32.xlu0 %v401, 72
        %v2131 = vpop.permute.xlu0 %2130
        %2132 = vrot.lane.b32.xlu0 %v401, 8
        %v2133 = vpop.permute.xlu0 %2132
        %v2135 = vsel %vm429, %v2131, 0
        %v2138 = vsel %vm429, %v2133, 0
        %2140 = vmatprep.subr.bf16.mxu0 0
        %2141 = vmatpush1.bf16.xpose.msra.mxu0 0
        %2142 = vmatprep.subr.bf16.mxu0 0
        %2143 = vmatpush1.bf16.xpose.msra.mxu0 0
        %2144 = vmatprep.subr.bf16.mxu0 0
        %2145 = vmatpush1.bf16.xpose.msra.mxu0 0
        %2146 = vmatprep.subr.bf16.mxu0 0
        %2147 = vmatpush1.bf16.xpose.msra.mxu0 0
        %2148 = vmatprep.subr.bf16.mxu0 0
        %2149 = vmatpush1.bf16.xpose.msra.mxu0 0
        %2150 = vmatprep.subr.bf16.mxu0 0
        %2151 = vmatpush1.bf16.xpose.msra.mxu0 0
        %2152 = vmatprep.subr.bf16.mxu0 0
        %2153 = vmatpush1.bf16.xpose.msra.mxu0 0
        %2154 = vmatprep.subr.bf16.mxu0 0
        %2155 = vmatpush1.bf16.xpose.msra.mxu0 %v2138
        %2156 = vmatprep.subr.bf16.mxu0 0
        %2157 = vmatpush2.bf16.xpose.msra.mxu0 0
        %2158 = vmatprep.subr.bf16.mxu0 0
        %2159 = vmatpush2.bf16.xpose.msra.mxu0 0
        %2160 = vmatprep.subr.bf16.mxu0 0
        %2161 = vmatpush2.bf16.xpose.msra.mxu0 0
        %2162 = vmatprep.subr.bf16.mxu0 0
        %2163 = vmatpush2.bf16.xpose.msra.mxu0 0
        %2164 = vmatprep.subr.bf16.mxu0 0
        %2165 = vmatpush2.bf16.xpose.msra.mxu0 0
        %2166 = vmatprep.subr.bf16.mxu0 0
        %2167 = vmatpush2.bf16.xpose.msra.mxu0 0
        %2168 = vmatprep.subr.bf16.mxu0 0
        %2169 = vmatpush2.bf16.xpose.msra.mxu0 0
        %2170 = vmatprep.subr.bf16.mxu0 0
        %2171 = vmatpush2.bf16.xpose.msra.mxu0 0
        %2172 = vmatprep.mubr.bf16.mxu0 0
        %2173 = vmatmul.mubr.bf16.gmra.mxu0 %v2135
        %v2174 = vpop.f32.mrf.mxu0
        %v2175 = vadd.f32 %v424, %v2174
        %v2176 = vpop.f32.mrf.mxu0
        %v2177 = vpop.f32.mrf.mxu0
        %v2178 = vadd.f32 %v425, %v2177
        %v2179 = vpop.f32.mrf.mxu0
        %2180 = vdwg.mxu0
        %2181 = vrot.lane.b32.xlu0 %v403, 72
        %v2182 = vpop.permute.xlu0 %2181
        %2183 = vrot.lane.b32.xlu0 %v403, 8
        %v2184 = vpop.permute.xlu0 %2183
        %v2186 = vsel %vm429, %v2182, 0
        %v2189 = vsel %vm429, %v2184, 0
        %2191 = vmatprep.subr.bf16.mxu0 0
        %2192 = vmatpush1.bf16.xpose.msra.mxu0 0
        %2193 = vmatprep.subr.bf16.mxu0 0
        %2194 = vmatpush1.bf16.xpose.msra.mxu0 0
        %2195 = vmatprep.subr.bf16.mxu0 0
        %2196 = vmatpush1.bf16.xpose.msra.mxu0 0
        %2197 = vmatprep.subr.bf16.mxu0 0
        %2198 = vmatpush1.bf16.xpose.msra.mxu0 0
        %2199 = vmatprep.subr.bf16.mxu0 0
        %2200 = vmatpush1.bf16.xpose.msra.mxu0 0
        %2201 = vmatprep.subr.bf16.mxu0 0
        %2202 = vmatpush1.bf16.xpose.msra.mxu0 0
        %2203 = vmatprep.subr.bf16.mxu0 0
        %2204 = vmatpush1.bf16.xpose.msra.mxu0 0
        %2205 = vmatprep.subr.bf16.mxu0 0
        %2206 = vmatpush1.bf16.xpose.msra.mxu0 %v2189
        %2207 = vmatprep.subr.bf16.mxu0 0
        %2208 = vmatpush2.bf16.xpose.msra.mxu0 0
        %2209 = vmatprep.subr.bf16.mxu0 0
        %2210 = vmatpush2.bf16.xpose.msra.mxu0 0
        %2211 = vmatprep.subr.bf16.mxu0 0
        %2212 = vmatpush2.bf16.xpose.msra.mxu0 0
        %2213 = vmatprep.subr.bf16.mxu0 0
        %2214 = vmatpush2.bf16.xpose.msra.mxu0 0
        %2215 = vmatprep.subr.bf16.mxu0 0
        %2216 = vmatpush2.bf16.xpose.msra.mxu0 0
        %2217 = vmatprep.subr.bf16.mxu0 0
        %2218 = vmatpush2.bf16.xpose.msra.mxu0 0
        %2219 = vmatprep.subr.bf16.mxu0 0
        %2220 = vmatpush2.bf16.xpose.msra.mxu0 0
        %2221 = vmatprep.subr.bf16.mxu0 0
        %2222 = vmatpush2.bf16.xpose.msra.mxu0 0
        %2223 = vmatprep.mubr.bf16.mxu0 0
        %2224 = vmatmul.mubr.bf16.gmra.mxu0 %v2186
        %v2225 = vpop.f32.mrf.mxu0
        %v2226 = vadd.f32 %v424, %v2225
        %v2227 = vpop.f32.mrf.mxu0
        %v2228 = vpop.f32.mrf.mxu0
        %v2229 = vadd.f32 %v425, %v2228
        %v2230 = vpop.f32.mrf.mxu0
        %2231 = vdwg.mxu0
        %v2232 = vsel %vm527, %v2175, -inf
        %2233 = vmax.xlane.f32.xlu0 %v2232
        %v2234 = vpop.xlane.xlu0 %2233
        %v2235 = vsel %vm527, %v2178, -inf
        %2236 = vmax.xlane.f32.xlu0 %v2235
        %v2237 = vpop.xlane.xlu0 %2236
        %v2238 = vsel %vm527, %v2226, -inf
        %2239 = vmax.xlane.f32.xlu0 %v2238
        %v2240 = vpop.xlane.xlu0 %2239
        %v2241 = vsel %vm527, %v2229, -inf
        %2242 = vmax.xlane.f32.xlu0 %v2241
        %v2243 = vpop.xlane.xlu0 %2242
        %v2244 = vsub.f32 %v2175, %v2234
        %v2245 = vsub.f32 %v2178, %v2237
        %v2246 = vsub.f32 %v2226, %v2240
        %v2247 = vsub.f32 %v2229, %v2243
        %v2248 = vmul.f32 %v2244, 1.442695
        %v2249 = vpow.pop %v2248
        %v2250 = vmul.f32 %v2245, 1.442695
        %v2251 = vpow.pop %v2250
        %v2252 = vmul.f32 %v2246, 1.442695
        %v2253 = vpow.pop %v2252
        %v2254 = vmul.f32 %v2247, 1.442695
        %v2255 = vpow.pop %v2254
        %v2256 = vsel %vm527, %v2249, 0.0
        %2257 = vadd.xlane.f32.xlu0 %v2256
        %v2258 = vpop.xlane.xlu0 %2257
        %v2259 = vsel %vm527, %v2251, 0.0
        %2260 = vadd.xlane.f32.xlu0 %v2259
        %v2261 = vpop.xlane.xlu0 %2260
        %v2262 = vsel %vm527, %v2253, 0.0
        %2263 = vadd.xlane.f32.xlu0 %v2262
        %v2264 = vpop.xlane.xlu0 %2263
        %v2265 = vsel %vm527, %v2255, 0.0
        %2266 = vadd.xlane.f32.xlu0 %v2265
        %v2267 = vpop.xlane.xlu0 %2266
        %v2268 = vrcp.pop %v2258
        %v2269 = vrcp.pop %v2261
        %v2270 = vrcp.pop %v2264
        %v2271 = vrcp.pop %v2267
        %v2272 = vmul.f32 %v2249, %v2268
        %v2273 = vmul.f32 %v2251, %v2269
        %v2274 = vmul.f32 %v2253, %v2270
        %v2275 = vmul.f32 %v2255, %v2271
        %v2276 = vpack.c.bf16 %v2273, %v2272
        %v2277 = vpack.c.bf16 %v2275, %v2274
        %2278 = vrot.lane.b32.xlu0 %v402, 72
        %v2279 = vpop.permute.xlu0 %2278
        %v2282 = vsel %vm527, %v2276, 0
        %2284 = vmatprep.subr.bf16.mxu0 0
        %2285 = vmatpush1.bf16.msra.mxu0 0
        %2286 = vmatprep.subr.bf16.mxu0 0
        %2287 = vmatpush1.bf16.msra.mxu0 0
        %2288 = vmatprep.subr.bf16.mxu0 0
        %2289 = vmatpush1.bf16.msra.mxu0 0
        %2290 = vmatprep.subr.bf16.mxu0 0
        %2291 = vmatpush1.bf16.msra.mxu0 0
        %2292 = vmatprep.subr.bf16.mxu0 0
        %2293 = vmatpush1.bf16.msra.mxu0 0
        %2294 = vmatprep.subr.bf16.mxu0 0
        %2295 = vmatpush1.bf16.msra.mxu0 0
        %2296 = vmatprep.subr.bf16.mxu0 0
        %2297 = vmatpush1.bf16.msra.mxu0 0
        %2298 = vmatprep.subr.bf16.mxu0 0
        %2299 = vmatpush1.bf16.msra.mxu0 %v2279
        %2300 = vmatprep.subr.bf16.mxu0 0
        %2301 = vmatpush2.bf16.msra.mxu0 0
        %2302 = vmatprep.subr.bf16.mxu0 0
        %2303 = vmatpush2.bf16.msra.mxu0 0
        %2304 = vmatprep.subr.bf16.mxu0 0
        %2305 = vmatpush2.bf16.msra.mxu0 0
        %2306 = vmatprep.subr.bf16.mxu0 0
        %2307 = vmatpush2.bf16.msra.mxu0 0
        %2308 = vmatprep.subr.bf16.mxu0 0
        %2309 = vmatpush2.bf16.msra.mxu0 0
        %2310 = vmatprep.subr.bf16.mxu0 0
        %2311 = vmatpush2.bf16.msra.mxu0 0
        %2312 = vmatprep.subr.bf16.mxu0 0
        %2313 = vmatpush2.bf16.msra.mxu0 0
        %2314 = vmatprep.subr.bf16.mxu0 0
        %2315 = vmatpush2.bf16.msra.mxu0 0
        %2316 = vmatprep.mubr.bf16.mxu0 0
        %2317 = vmatmul.mubr.bf16.gmra.mxu0 %v2282
        %v2318 = vpop.f32.mrf.mxu0
        %v2319 = vadd.f32 0.0, %v2318
        %v2320 = vpop.f32.mrf.mxu0
        %v2321 = vpop.f32.mrf.mxu0
        %v2322 = vadd.f32 0.0, %v2321
        %v2323 = vpop.f32.mrf.mxu0
        %2324 = vdwg.mxu0
        %2325 = vrot.lane.b32.xlu0 %v404, 72
        %v2326 = vpop.permute.xlu0 %2325
        %v2329 = vsel %vm527, %v2277, 0
        %2331 = vmatprep.subr.bf16.mxu0 0
        %2332 = vmatpush1.bf16.msra.mxu0 0
        %2333 = vmatprep.subr.bf16.mxu0 0
        %2334 = vmatpush1.bf16.msra.mxu0 0
        %2335 = vmatprep.subr.bf16.mxu0 0
        %2336 = vmatpush1.bf16.msra.mxu0 0
        %2337 = vmatprep.subr.bf16.mxu0 0
        %2338 = vmatpush1.bf16.msra.mxu0 0
        %2339 = vmatprep.subr.bf16.mxu0 0
        %2340 = vmatpush1.bf16.msra.mxu0 0
        %2341 = vmatprep.subr.bf16.mxu0 0
        %2342 = vmatpush1.bf16.msra.mxu0 0
        %2343 = vmatprep.subr.bf16.mxu0 0
        %2344 = vmatpush1.bf16.msra.mxu0 0
        %2345 = vmatprep.subr.bf16.mxu0 0
        %2346 = vmatpush1.bf16.msra.mxu0 %v2326
        %2347 = vmatprep.subr.bf16.mxu0 0
        %2348 = vmatpush2.bf16.msra.mxu0 0
        %2349 = vmatprep.subr.bf16.mxu0 0
        %2350 = vmatpush2.bf16.msra.mxu0 0
        %2351 = vmatprep.subr.bf16.mxu0 0
        %2352 = vmatpush2.bf16.msra.mxu0 0
        %2353 = vmatprep.subr.bf16.mxu0 0
        %2354 = vmatpush2.bf16.msra.mxu0 0
        %2355 = vmatprep.subr.bf16.mxu0 0
        %2356 = vmatpush2.bf16.msra.mxu0 0
        %2357 = vmatprep.subr.bf16.mxu0 0
        %2358 = vmatpush2.bf16.msra.mxu0 0
        %2359 = vmatprep.subr.bf16.mxu0 0
        %2360 = vmatpush2.bf16.msra.mxu0 0
        %2361 = vmatprep.subr.bf16.mxu0 0
        %2362 = vmatpush2.bf16.msra.mxu0 0
        %2363 = vmatprep.mubr.bf16.mxu0 0
        %2364 = vmatmul.mubr.bf16.gmra.mxu0 %v2329
        %v2365 = vpop.f32.mrf.mxu0
        %v2366 = vadd.f32 0.0, %v2365
        %v2367 = vpop.f32.mrf.mxu0
        %v2368 = vpop.f32.mrf.mxu0
        %v2369 = vadd.f32 0.0, %v2368
        %v2370 = vpop.f32.mrf.mxu0
        %2371 = vdwg.mxu0
        %v2372 = vpack.c.bf16 %v2322, %v2319
        %v2373 = vpack.c.bf16 %v2369, %v2366
        %2376 = vrot.lane.b32.xlu0 %v908, 8
        %v2377 = vpop.permute.xlu0 %2376
        %2378 = vrot.lane.b32.xlu0 %v909, 8
        %v2379 = vpop.permute.xlu0 %2378
        %2382 = vrot.lane.b32.xlu0 %v1152, 16
        %v2383 = vpop.permute.xlu0 %2382
        %2384 = vrot.lane.b32.xlu0 %v1153, 16
        %v2385 = vpop.permute.xlu0 %2384
        %2388 = vrot.lane.b32.xlu0 %v1396, 24
        %v2389 = vpop.permute.xlu0 %2388
        %2390 = vrot.lane.b32.xlu0 %v1397, 24
        %v2391 = vpop.permute.xlu0 %2390
        %2394 = vrot.lane.b32.xlu0 %v1640, 32
        %v2395 = vpop.permute.xlu0 %2394
        %2396 = vrot.lane.b32.xlu0 %v1641, 32
        %v2397 = vpop.permute.xlu0 %2396
        %2400 = vrot.lane.b32.xlu0 %v1884, 40
        %v2401 = vpop.permute.xlu0 %2400
        %2402 = vrot.lane.b32.xlu0 %v1885, 40
        %v2403 = vpop.permute.xlu0 %2402
        %2406 = vrot.lane.b32.xlu0 %v2128, 48
        %v2407 = vpop.permute.xlu0 %2406
        %2408 = vrot.lane.b32.xlu0 %v2129, 48
        %v2409 = vpop.permute.xlu0 %2408
        %2412 = vrot.lane.b32.xlu0 %v2372, 56
        %v2413 = vpop.permute.xlu0 %2412
        %2414 = vrot.lane.b32.xlu0 %v2373, 56
        %v2415 = vpop.permute.xlu0 %2414
        %v2418 = vsel %vm429, %v662, %v2377
        %v2421 = vsel %vm429, %v663, %v2379
        %v2423 = vsel %vm527, %v2418, %v2383
        %v2425 = vsel %vm527, %v2421, %v2385
        %vm2426 = vcmask 195584
        %v2428 = vsel %vm2426, %v2423, %v2389
        %v2430 = vsel %vm2426, %v2425, %v2391
        %vm2431 = vcmask 261120
        %v2433 = vsel %vm2431, %v2428, %v2395
        %v2435 = vsel %vm2431, %v2430, %v2397
        %vm2436 = vcmask 326656
        %v2438 = vsel %vm2436, %v2433, %v2401
        %v2440 = vsel %vm2436, %v2435, %v2403
        %vm2441 = vcmask 392192
        %v2443 = vsel %vm2441, %v2438, %v2407
        %v2445 = vsel %vm2441, %v2440, %v2409
        %vm2446 = vcmask 457728
        %v2448 = vsel %vm2446, %v2443, %v2413
        %v2450 = vsel %vm2446, %v2445, %v2415
        %v2451 = vld [vmem:[#allocation7] sm:$0xf]
        %v2452 = vld [vmem:[#allocation7 + $0x4] sm:$0xf]
        %v2453 = vld [vmem:[#allocation7 + $0x8] sm:$0xf]
        %v2454 = vld [vmem:[#allocation7 + $0xc] sm:$0xf]
        %v2455 = vld [vmem:[#allocation7 + $0x10] sm:$0xf]
        %v2456 = vld [vmem:[#allocation7 + $0x14] sm:$0xf]
        %v2457 = vld [vmem:[#allocation7 + $0x18] sm:$0xf]
        %v2458 = vld [vmem:[#allocation7 + $0x1c] sm:$0xf]
        %v2459 = vld [vmem:[%s4] sm:$0x1]
        %v2461 = vlaneseq
        %v2462 = vshrl.u32 %v2461, 7
        %v2463 = vsub.s32 0, %v2462
        %v2464 = vrot.slane %v2459, %v2463
        %v2474 = vunpack.c.l.b16 %v2451
        %v2475 = vunpack.c.l.b16 %v2452
        %v2476 = vunpack.c.l.b16 %v2453
        %v2477 = vunpack.c.l.b16 %v2454
        %v2478 = vunpack.c.l.b16 %v2455
        %v2479 = vunpack.c.l.b16 %v2456
        %v2480 = vunpack.c.l.b16 %v2457
        %v2481 = vunpack.c.l.b16 %v2458
        %v2482 = vpack.c.b16 %v2475, %v2474
        %v2483 = vpack.c.b16 %v2477, %v2476
        %v2484 = vpack.c.b16 %v2479, %v2478
        %v2485 = vpack.c.b16 %v2481, %v2480
        %v2490 = vsel %vm341, %v2448, 0
        %v2492 = vsel %vm341, %v2450, 0
        %2494 = vmatprep.subr.bf16.mxu0 0
        %2495 = vmatpush1.bf16.msra.mxu0 0
        %2496 = vmatprep.subr.bf16.mxu0 0
        %2497 = vmatpush1.bf16.msra.mxu0 0
        %2498 = vmatprep.subr.bf16.mxu0 0
        %2499 = vmatpush1.bf16.msra.mxu0 0
        %2500 = vmatprep.subr.bf16.mxu0 0
        %2501 = vmatpush1.bf16.msra.mxu0 0
        %2502 = vmatprep.subr.bf16.mxu0 0
        %2503 = vmatpush1.bf16.msra.mxu0 %v2485
        %2504 = vmatprep.subr.bf16.mxu0 0
        %2505 = vmatpush1.bf16.msra.mxu0 %v2484
        %2506 = vmatprep.subr.bf16.mxu0 0
        %2507 = vmatpush1.bf16.msra.mxu0 %v2483
        %2508 = vmatprep.subr.bf16.mxu0 0
        %2509 = vmatpush1.bf16.msra.mxu0 %v2482
        %2510 = vmatprep.subr.bf16.mxu0 0
        %2511 = vmatpush2.bf16.msra.mxu0 0
        %2512 = vmatprep.subr.bf16.mxu0 0
        %2513 = vmatpush2.bf16.msra.mxu0 0
        %2514 = vmatprep.subr.bf16.mxu0 0
        %2515 = vmatpush2.bf16.msra.mxu0 0
        %2516 = vmatprep.subr.bf16.mxu0 0
        %2517 = vmatpush2.bf16.msra.mxu0 0
        %2518 = vmatprep.subr.bf16.mxu0 0
        %2519 = vmatpush2.bf16.msra.mxu0 0
        %2520 = vmatprep.subr.bf16.mxu0 0
        %2521 = vmatpush2.bf16.msra.mxu0 0
        %2522 = vmatprep.subr.bf16.mxu0 0
        %2523 = vmatpush2.bf16.msra.mxu0 0
        %2524 = vmatprep.subr.bf16.mxu0 0
        %2525 = vmatpush2.bf16.msra.mxu0 0
        %2526 = vmatprep.mubr.bf16.mxu0 0
        %2527 = vmatmul.mubr.bf16.gmra.mxu0 %v2490
        %v2528 = vpop.f32.mrf.mxu0
        %v2529 = vadd.f32 %v2464, %v2528
        %v2530 = vpop.f32.mrf.mxu0
        %v2531 = vpop.f32.mrf.mxu0
        %v2532 = vadd.f32 %v2464, %v2531
        %v2533 = vpop.f32.mrf.mxu0
        %2534 = vmatprep.mubr.bf16.mxu0 0
        %2535 = vmatmul.mubr.bf16.gmra.mxu0 %v2492
        %v2536 = vpop.f32.mrf.mxu0
        %v2537 = vadd.f32 %v2464, %v2536
        %v2538 = vpop.f32.mrf.mxu0
        %v2539 = vpop.f32.mrf.mxu0
        %v2540 = vadd.f32 %v2464, %v2539
        %v2541 = vpop.f32.mrf.mxu0
        %2542 = vdwg.mxu0
        %v2543 = vpack.c.bf16 %v2532, %v2529
        %v2544 = vpack.c.bf16 %v2540, %v2537
        %v2547 = vunpack.c.l.b16 %v2543
        %v2548 = vunpack.c.h.b16 %v2543
        %v2549 = vunpack.c.l.b16 %v2544
        %v2550 = vunpack.c.h.b16 %v2544
        %v2551 = vpack.c.b16 %v2547, %v2547
        %v2552 = vpack.c.b16 %v2548, %v2548
        %v2553 = vpack.c.b16 %v2549, %v2549
        %v2554 = vpack.c.b16 %v2550, %v2550
        %vm2559 = vcmask 519168
        %2560 = vst.msk [vmem:[%s271] sm:$0xf] %vm2559, %v2551
        %2561 = vst.msk [vmem:[%s271 + $0x4] sm:$0xf] %vm2559, %v2552
        %2562 = vst.msk [vmem:[%s271 + $0x8] sm:$0xf] %vm2559, %v2553
        %2563 = vst.msk [vmem:[%s271 + $0xc] sm:$0xf] %vm2559, %v2554
        %s2564 = sand.u32 %s141, 1
        %s2565 = scalar_lea.sflag [#allocation4], %s2564
        %s2566 = sand.u32 %s141, 1
        %s2567 = smul.addr %s2566, 16
        %s2568 = scalar_lea.vmem [#allocation8], %s2567
        // Predicated region
        $region53: #{tpu_custom_call.1} parent=39 // pred_check
          %p2569 = pneg %p151
        $region54: #{tpu_custom_call.1} parent=39 // pred_check_branch
          %2571 = sbr.rel (%p2569) target = $region56
        $region55: #{tpu_custom_call.1} parent=39 // pred_region
          %s2572 = smul.u32 4, %s23
          %s2574 = ssub.s32 256, 256
          %2575 = vsyncadd %s2565, %s2574
          %s2576 = smul.addr %s2572, 64
          %s2577 = scalar_lea.hbm %s5, %s2576
          %s2578 = sshll.u32 %s2568, 4
          %s2579 = int_to_ptr.vmem [resolvable:$true] %s2578
          %2584 = dma.vmem_to_hbm [thread:$0]  %s2579, 256, %s2577, %s2565, 64, 64, 4
        $region56: #{tpu_custom_call.1} parent=39 // pred_fallthru
          _
      $region40: #{tpu_custom_call.1} parent=5 // pred_fallthru
        _
      %p2585 = scmp.le.s32.totalorder 2, %s18
      // Predicated region
      $region57: #{tpu_custom_call.1} parent=5 // pred_check
        %p2586 = pneg %p2585
      $region58: #{tpu_custom_call.1} parent=5 // pred_check_branch
        %2588 = sbr.rel (%p2586) target = $region60
      $region59: #{tpu_custom_call.1} parent=5 // pred_region
        %s2589 = ssub.s32 %s18, 2
        // Predicated region
        $region61: #{tpu_custom_call.1} parent=59 // pred_check
          %p2590 = pneg %p157
        $region62: #{tpu_custom_call.1} parent=59 // pred_check_branch
          %2592 = sbr.rel (%p2590) target = $region64
        $region63: #{tpu_custom_call.1} parent=59 // pred_region
          %s2593 = sand.u32 %s142, 1
          %s2594 = scalar_lea.sflag [#allocation4], %s2593
          %s2595 = sand.u32 %s142, 1
          %s2596 = smul.addr %s2595, 16
          %s2597 = scalar_lea.vmem [#allocation8], %s2596
          %2598 = dma.done %s2594, 256
        $region64: #{tpu_custom_call.1} parent=59 // pred_fallthru
          _
      $region60: #{tpu_custom_call.1} parent=5 // pred_fallthru
        _
    $region6: #{tpu_custom_call.1} parent=1 // loop_footer
      %s22 = sadd.s32 1, %s18
    $region7: #{tpu_custom_call.1} parent=1 // loop_footer_branch
      %17 = sbr.rel target = $region3
    $region8: #{tpu_custom_call.1} parent=1 // loop_exit
      _
    %2599 = vsyncpa [#allocation3], 1
    %s2600 = scalar_lea.sflag [#allocation3], 1
    %2601 = vsyncpa %s2600, 1
    %2602 = vsyncpa [#allocation6], 1
    %2603 = vsyncpa [#allocation4], 1
    %s2604 = scalar_lea.sflag [#allocation4], 1
    %2605 = vsyncpa %s2604, 1

</llo_original>
